<compile_context>
chip_gen: v5e
topology: v5e:2x2
jax: 0.10.0
libtpu: 0.0.40
codegen_flags: <defaults>
</compile_context>

<pallas_src>
import jax
import jax.numpy as jnp
from jax.experimental import pallas as pl
from jax.experimental.pallas import tpu as pltpu

NEG_SLOPE = 0.2
BN_EPS = 1e-5
LANE = 128
SUBLANE = 16                      # bf16 sublane packing -> M tiles are multiples of 16


def _round_up(x, m):
    return (x + m - 1) // m * m


_VMEM_CFG = None


def _vmem_config():
    """(budget, limit) adapted to the local TPU generation.

    v4/v5e/v5p/v6e have 128 MiB VMEM/core -> raise the scoped limit; v7x has 64 MiB and
    v2/v3 only 16 MiB -> stay conservative.  Unknown devices fall back to the v7x-safe
    setting."""
    global _VMEM_CFG
    if _VMEM_CFG is not None:
        return _VMEM_CFG
    kind = ""
    try:
        kind = jax.devices()[0].device_kind.lower()
    except Exception:
        pass
    if "v2" in kind or "v3" in kind:
        cap = 16 * 2 ** 20
    elif any(t in kind for t in ("v4", "v5", "v6")):
        cap = 128 * 2 ** 20
    else:
        cap = 64 * 2 ** 20        # v7x per-core VMEM / conservative default
    limit = min(3 * cap // 4, 100 * 2 ** 20)
    budget = max(limit - 8 * 2 ** 20, 3 * limit // 4)
    _VMEM_CFG = (budget, limit)
    return _VMEM_CFG


def _choose_tile_m(m, k, cp, out_bytes, budget):
    """Largest M tile whose double-buffered working set fits `budget`, then rebalanced so
    the padded Mp wastes at most one sublane per tile (same grid size)."""
    fixed = 2 * k * cp * 2 + 16 * cp * 4 + 64 * 1024    # weight (2x buffered) + vectors
    # TODO(synk): drop the 2x weight factor once the invariant weight is single-buffered.
    best = SUBLANE
    for tm in (4096, 2048, 1024, 512, 256, 128, 64, 32, 16):
        if fixed + 2 * tm * k * 2 + 2 * tm * cp * out_bytes <= budget:
            best = tm
            break
    g = -(-m // best)                                   # grid size with the largest tile
    tm = min(best, _round_up(-(-m // g), SUBLANE))      # balance tiles, keep same grid
    return max(tm, SUBLANE)


# -------------------- Pallas kernels --------------------

def _conv_bias_lrelu_kernel(p_ref, w_ref, b_ref, o_ref):
    # (tile_m, K) bf16 @ (K, Cp) bf16 -> f32, + bias, LeakyReLU(0.2), bf16 store.
    y = jnp.dot(p_ref[...], w_ref[...], preferred_element_type=jnp.float32) + b_ref[...]
    o_ref[...] = jnp.where(y > 0, y, NEG_SLOPE * y).astype(o_ref.dtype)


def _conv_stats_kernel(p_ref, w_ref, y_ref, s_ref):
    # Conv tile (bf16 store) + per-tile partial channel sums / sums-of-squares (f32).
    y = jnp.dot(p_ref[...], w_ref[...], preferred_element_type=jnp.float32)
    y_ref[...] = y.astype(y_ref.dtype)
    s_ref[0:1, :] = jnp.sum(y, axis=0, keepdims=True)        # two row writes, no concat
    s_ref[1:2, :] = jnp.sum(y * y, axis=0, keepdims=True)


def _bn_lrelu_kernel(y_ref, scale_ref, shift_ref, o_ref):
    # y*scale + shift (scale/shift precomputed from global stats) + LeakyReLU, bf16 store.
    y = y_ref[...].astype(jnp.float32) * scale_ref[...] + shift_ref[...]
    o_ref[...] = jnp.where(y > 0, y, NEG_SLOPE * y).astype(o_ref.dtype)


def _make_conv_bias_kernel(use_sigmoid):
    def kernel(p_ref, w_ref, b_ref, o_ref):
        y = jnp.dot(p_ref[...], w_ref[...], preferred_element_type=jnp.float32) + b_ref[...]
        if use_sigmoid:
            y = jax.nn.sigmoid(y)
        o_ref[...] = y.astype(o_ref.dtype)
    return kernel


# -------------------- pallas_call wrappers --------------------

def _mosaic_params(vmem_limit):
    return pltpu.CompilerParams(dimension_semantics=("parallel",),
                                vmem_limit_bytes=vmem_limit)


def _conv_bias_act_call(kernel, pmat, wmat, bvec, tile_m, out_dtype, vmem_limit):
    Mp, K = pmat.shape
    Cp = wmat.shape[1]
    ob = jnp.dtype(out_dtype).itemsize
    cost = pl.CostEstimate(flops=2 * Mp * K * Cp, transcendentals=0,
                           bytes_accessed=Mp * K * 2 + K * Cp * 2 + Cp * 4 + Mp * Cp * ob)
    return pl.pallas_call(
        kernel,
        out_shape=jax.ShapeDtypeStruct((Mp, Cp), out_dtype),
        grid_spec=pltpu.PrefetchScalarGridSpec(
            num_scalar_prefetch=0,
            grid=(Mp // tile_m,),
            in_specs=[pl.BlockSpec((tile_m, K), lambda i: (i, 0)),
                      pl.BlockSpec((K, Cp), lambda i: (0, 0)),
                      pl.BlockSpec((1, Cp), lambda i: (0, 0))],
            out_specs=pl.BlockSpec((tile_m, Cp), lambda i: (i, 0))),
        compiler_params=_mosaic_params(vmem_limit),
        cost_estimate=cost,
    )(pmat, wmat, bvec)


def _conv_stats_call(pmat, wmat, tile_m, vmem_limit):
    Mp, K = pmat.shape
    Cp = wmat.shape[1]
    G = Mp // tile_m
    cost = pl.CostEstimate(flops=2 * Mp * K * Cp + 3 * Mp * Cp, transcendentals=0,
                           bytes_accessed=Mp * K * 2 + K * Cp * 2 + Mp * Cp * 2 + G * 2 * Cp * 4)
    return pl.pallas_call(
        _conv_stats_kernel,
        out_shape=(jax.ShapeDtypeStruct((Mp, Cp), jnp.bfloat16),
                   jax.ShapeDtypeStruct((G, 2, Cp), jnp.float32)),
        grid_spec=pltpu.PrefetchScalarGridSpec(
            num_scalar_prefetch=0,
            grid=(G,),
            in_specs=[pl.BlockSpec((tile_m, K), lambda i: (i, 0)),
                      pl.BlockSpec((K, Cp), lambda i: (0, 0))],
            out_specs=(pl.BlockSpec((tile_m, Cp), lambda i: (i, 0)),
                       pl.BlockSpec((None, 2, Cp), lambda i: (i, 0, 0)))),
        # per-tile partial stats are disjoint writes -> fully parallel grid axis
        compiler_params=_mosaic_params(vmem_limit),
        cost_estimate=cost,
    )(pmat, wmat)


def _bn_lrelu_call(y, scale, shift, tile_m, vmem_limit):
    Mp, Cp = y.shape
    cost = pl.CostEstimate(flops=4 * Mp * Cp, transcendentals=0,
                           bytes_accessed=2 * Mp * Cp * 2 + 2 * Cp * 4)
    return pl.pallas_call(
        _bn_lrelu_kernel,
        out_shape=jax.ShapeDtypeStruct((Mp, Cp), jnp.bfloat16),
        grid_spec=pltpu.PrefetchScalarGridSpec(
            num_scalar_prefetch=0,
            grid=(Mp // tile_m,),
            in_specs=[pl.BlockSpec((tile_m, Cp), lambda i: (i, 0)),
                      pl.BlockSpec((1, Cp), lambda i: (0, 0)),
                      pl.BlockSpec((1, Cp), lambda i: (0, 0))],
            out_specs=pl.BlockSpec((tile_m, Cp), lambda i: (i, 0))),
        compiler_params=_mosaic_params(vmem_limit),
        cost_estimate=cost,
    )(y, scale, shift)


# -------------------- glue: im2col / weight reshape / padding / BN stats (plain JAX) ----

def _im2col(x_nhwc, k, stride, pad):
    # TODO(synk): fuse this gather into the conv kernel (halo-row DMA + shifted-slice
    # matmuls) so the 16x patch tensor never hits HBM.
    N, H, W, C = x_nhwc.shape
    xp = jnp.pad(x_nhwc, ((0, 0), (pad, pad), (pad, pad), (0, 0)))
    Ho = (H + 2 * pad - k) // stride + 1
    Wo = (W + 2 * pad - k) // stride + 1
    patches = []
    for i in range(k):
        for j in range(k):
            patches.append(xp[:, i:i + stride * Ho:stride, j:j + stride * Wo:stride, :])
    p = jnp.stack(patches, axis=3)   # (N, Ho, Wo, k*k, C) -- patch order (kh, kw, c_in)
    return p.reshape(N * Ho * Wo, k * k * C), Ho, Wo


def _w_to_mat(w_oihw):
    # PyTorch conv weight (C_out, C_in, kh, kw) -> (kh*kw*C_in, C_out), matching _im2col.
    co, ci, kh, kw = w_oihw.shape
    return jnp.transpose(w_oihw, (2, 3, 1, 0)).reshape(kh * kw * ci, co)


def _pad2(a, rows, cols, dtype):
    r, c = a.shape
    return jnp.pad(a, ((0, rows - r), (0, cols - c))).astype(dtype)


def _pad_vec(v, cols):
    return jnp.pad(v.astype(jnp.float32), (0, cols - v.shape[0])).reshape(1, cols)


def _bn_scale_shift(partials, gamma, beta, m_true, cout, cp):
    # O(num_tiles*C) reduction + O(C) affine prep; negligible vs. the tiled passes.
    stats = jnp.sum(partials, axis=0)                 # (2, Cp) f32
    inv_n = 1.0 / float(m_true)                       # true N*Ho*Wo; padded rows are zeros
    mean = stats[0] * inv_n
    var = jnp.maximum(stats[1] * inv_n - mean * mean, 0.0)   # biased var, clamp cancellation
    g = jnp.pad(gamma.astype(jnp.float32), (0, cp - cout))
    b = jnp.pad(beta.astype(jnp.float32), (0, cp - cout))
    scale = g * jax.lax.rsqrt(var + BN_EPS)
    shift = b - mean * scale
    return scale.reshape(1, cp), shift.reshape(1, cp)


# -------------------- parameter construction (mirrors NLayerDiscriminator.__init__) -----

def build_nlayer_discriminator_params(key, input_nc, ndf=64, n_layers=3):
    """norm_layer = BatchNorm2d => use_bias=False on the normed convs.
    Conv weights N(0, 0.02); first/last conv biases N(0, 0.02); BN gamma N(1, 0.02), beta 0."""
    kw, padw = 4, 1
    layers = []

    def conv_w(k_, co, ci):
        return 0.02 * jax.random.normal(k_, (co, ci, kw, kw), dtype=jnp.float32)

    key, k1, k2 = jax.random.split(key, 3)
    layers.append(dict(type="conv_lrelu", w=conv_w(k1, ndf, input_nc),
                       b=0.02 * jax.random.normal(k2, (ndf,), dtype=jnp.float32),
                       k=kw, stride=2, pad=padw))

    nf_mult = 1
    for n in range(1, n_layers):
        nf_mult_prev, nf_mult = nf_mult, min(2 ** n, 8)
        key, k1, k2 = jax.random.split(key, 3)
        co = ndf * nf_mult
        layers.append(dict(type="conv_bn_lrelu", w=conv_w(k1, co, ndf * nf_mult_prev),
                           gamma=1.0 + 0.02 * jax.random.normal(k2, (co,), dtype=jnp.float32),
                           beta=jnp.zeros((co,), dtype=jnp.float32),
                           k=kw, stride=2, pad=padw))

    nf_mult_prev, nf_mult = nf_mult, min(2 ** n_layers, 8)
    key, k1, k2 = jax.random.split(key, 3)
    co = ndf * nf_mult
    layers.append(dict(type="conv_bn_lrelu", w=conv_w(k1, co, ndf * nf_mult_prev),
                       gamma=1.0 + 0.02 * jax.random.normal(k2, (co,), dtype=jnp.float32),
                       beta=jnp.zeros((co,), dtype=jnp.float32),
                       k=kw, stride=1, pad=padw))

    key, k1, k2 = jax.random.split(key, 3)
    layers.append(dict(type="conv", w=conv_w(k1, 1, ndf * nf_mult),
                       b=0.02 * jax.random.normal(k2, (1,), dtype=jnp.float32),
                       k=kw, stride=1, pad=padw))
    return layers


# -------------------- forward passes --------------------

def nlayer_discriminator_forward(params, x_nchw, use_sigmoid=False):
    budget, vmem_limit = _vmem_config()
    # NCHW -> NHWC; activations kept in bf16 between layers (halves HBM traffic).
    x = jnp.transpose(x_nchw, (0, 2, 3, 1)).astype(jnp.bfloat16)
    N = x.shape[0]
    for layer in params:
        patches, Ho, Wo = _im2col(x, layer["k"], layer["stride"], layer["pad"])
        wm = _w_to_mat(layer["w"])
        M, K = patches.shape
        Cout = wm.shape[1]
        Cp = _round_up(Cout, LANE)                 # lane-dense output; K left unpadded
        is_head = layer["type"] == "conv"
        out_bytes = 4 if is_head else 2
        tile_m = _choose_tile_m(M, K, Cp, out_bytes, budget)
        Mp = _round_up(M, tile_m)
        pmat = _pad2(patches, Mp, K, jnp.bfloat16)     # bf16 MXU operands, f32 accumulation
        wmat = _pad2(wm, K, Cp, jnp.bfloat16)

        if layer["type"] == "conv_lrelu":
            out = _conv_bias_act_call(_conv_bias_lrelu_kernel, pmat, wmat,
                                      _pad_vec(layer["b"], Cp), tile_m,
                                      jnp.bfloat16, vmem_limit)
        elif layer["type"] == "conv_bn_lrelu":
            y, partials = _conv_stats_call(pmat, wmat, tile_m, vmem_limit)
            scale, shift = _bn_scale_shift(partials, layer["gamma"], layer["beta"],
                                           M, Cout, Cp)
            out = _bn_lrelu_call(y, scale, shift, tile_m, vmem_limit)
        else:  # final conv head (+ optional sigmoid), f32 output
            out = _conv_bias_act_call(_make_conv_bias_kernel(use_sigmoid), pmat, wmat,
                                      _pad_vec(layer["b"], Cp), tile_m,
                                      jnp.float32, vmem_limit)

        x = out[:M, :Cout].reshape(N, Ho, Wo, Cout)
    return jnp.transpose(x.astype(jnp.float32), (0, 3, 1, 2))   # back to NCHW


def reference_forward(params, x_nchw, use_sigmoid=False):
    # Pure-JAX reference (lax.conv + train-mode BatchNorm + LeakyReLU) for a sanity check.
    x = x_nchw.astype(jnp.float32)
    for layer in params:
        y = jax.lax.conv_general_dilated(
            x, layer["w"], (layer["stride"],) * 2,
            [(layer["pad"], layer["pad"])] * 2,
            dimension_numbers=("NCHW", "OIHW", "NCHW"))
        if "b" in layer:
            y = y + layer["b"].reshape(1, -1, 1, 1)
        if layer["type"] == "conv_bn_lrelu":
            mean = jnp.mean(y, axis=(0, 2, 3), keepdims=True)
            var = jnp.mean(jnp.square(y - mean), axis=(0, 2, 3), keepdims=True)
            y = (y - mean) * jax.lax.rsqrt(var + BN_EPS)
            y = y * layer["gamma"].reshape(1, -1, 1, 1) + layer["beta"].reshape(1, -1, 1, 1)
        if layer["type"] in ("conv_lrelu", "conv_bn_lrelu"):
            y = jnp.where(y > 0, y, NEG_SLOPE * y)
        elif use_sigmoid:
            y = jax.nn.sigmoid(y)
        x = y
    return x


if __name__ == "__main__":
    # isize=32 is the smallest spatial size that survives the default n_layers=3 stack
    # (32 -> 16 -> 8 -> 4 -> 3 -> 2); ndf kept small.
    batch, input_nc, isize = 2, 3, 32
    ndf, n_layers = 8, 3

    key = jax.random.PRNGKey(0)
    key, kx, kp = jax.random.split(key, 3)
    x = jax.random.normal(kx, (batch, input_nc, isize, isize), dtype=jnp.float32)

    params = build_nlayer_discriminator_params(kp, input_nc, ndf=ndf, n_layers=n_layers)

    fwd = jax.jit(lambda inp: nlayer_discriminator_forward(params, inp))
    out = jax.block_until_ready(fwd(x))
    assert out.shape == (batch, 1, 2, 2), out.shape

    ref = jax.block_until_ready(reference_forward(params, x))
    max_err = float(jnp.max(jnp.abs(out - ref)))
    # bf16 operands + bf16 intermediate activations (intentional perf choice) vs f32 ref.
    assert jnp.allclose(out, ref, rtol=5e-2, atol=7.5e-2), f"max_err={max_err}"

    print("KERNEL_OK")
</pallas_src>

<mosaic_0001>
module attributes {stable_mosaic.version = 11 : i64} {
  func.func @_conv_bias_lrelu_kernel(%arg0: i32, %arg1: memref<512x48xbf16, #tpu.memory_space<vmem>>, %arg2: memref<48x128xbf16, #tpu.memory_space<vmem>>, %arg3: memref<1x128xf32, #tpu.memory_space<vmem>>, %arg4: memref<512x128xbf16, #tpu.memory_space<vmem>>) attributes {dimension_semantics = [#tpu.dimension_semantics<parallel>], iteration_bounds = array<i64: 1>, scalar_prefetch = 0 : i64, scratch_operands = 0 : i64, tpu.core_type = #tpu.core_type<tc>, window_params = [{transform_indices = @transform_0, window_bounds = array<i64: 512, 48>}, {pipeline_mode = #tpu.pipeline_mode<synchronous>, transform_indices = @transform_1, window_bounds = array<i64: 48, 128>}, {pipeline_mode = #tpu.pipeline_mode<synchronous>, transform_indices = @transform_2, window_bounds = array<i64: 1, 128>}, {transform_indices = @transform_3, window_bounds = array<i64: 512, 128>}]} {
    %c0 = arith.constant 0 : index
    %c0_0 = arith.constant 0 : index
    %0 = vector.load %arg1[%c0, %c0_0] : memref<512x48xbf16, #tpu.memory_space<vmem>>, vector<512x48xbf16>
    %c0_1 = arith.constant 0 : index
    %c0_2 = arith.constant 0 : index
    %1 = vector.load %arg2[%c0_1, %c0_2] : memref<48x128xbf16, #tpu.memory_space<vmem>>, vector<48x128xbf16>
    %cst = arith.constant dense<0.000000e+00> : vector<512x128xf32>
    %2 = tpu.matmul %0, %1, %cst {dimension_numbers = #tpu.dot_dimension_numbers<[1], [0], [0], [1], [0, 0, 1, 1], [], []>} : vector<512x48xbf16>, vector<48x128xbf16>, vector<512x128xf32> -> vector<512x128xf32>
    %c0_3 = arith.constant 0 : index
    %c0_4 = arith.constant 0 : index
    %3 = vector.load %arg3[%c0_3, %c0_4] : memref<1x128xf32, #tpu.memory_space<vmem>>, vector<1x128xf32>
    %4 = vector.broadcast %3 : vector<1x128xf32> to vector<512x128xf32>
    %5 = arith.addf %2, %4 : vector<512x128xf32>
    %cst_5 = arith.constant 0.000000e+00 : f32
    %6 = vector.broadcast %cst_5 : f32 to vector<512x128xf32>
    %7 = arith.cmpf ogt, %5, %6 : vector<512x128xf32>
    %cst_6 = arith.constant 2.000000e-01 : f32
    %8 = vector.broadcast %cst_6 : f32 to vector<512x128xf32>
    %9 = arith.mulf %8, %5 : vector<512x128xf32>
    %10 = arith.select %7, %5, %9 : vector<512x128xi1>, vector<512x128xf32>
    %11 = arith.truncf %10 : vector<512x128xf32> to vector<512x128xbf16>
    %c0_7 = arith.constant 0 : index
    %c0_8 = arith.constant 0 : index
    %12 = vector.load %arg4[%c0_7, %c0_8] : memref<512x128xbf16, #tpu.memory_space<vmem>>, vector<512x128xbf16>
    tpu.vector_store %arg4[%c0_7, %c0_8], %11 {strides = array<i32>} : memref<512x128xbf16, #tpu.memory_space<vmem>>, vector<512x128xbf16>,
    return
  }
  func.func @transform_0(%arg0: i32) -> (i32, i32) {
    %c0_i32 = arith.constant 0 : i32
    %c0_i32_0 = arith.constant 0 : i32
    return %arg0, %c0_i32 : i32, i32
  }
  func.func @transform_1(%arg0: i32) -> (i32, i32) {
    %c0_i32 = arith.constant 0 : i32
    %c0_i32_0 = arith.constant 0 : i32
    %c0_i32_1 = arith.constant 0 : i32
    return %c0_i32, %c0_i32_0 : i32, i32
  }
  func.func @transform_2(%arg0: i32) -> (i32, i32) {
    %c0_i32 = arith.constant 0 : i32
    %c0_i32_0 = arith.constant 0 : i32
    %c0_i32_1 = arith.constant 0 : i32
    return %c0_i32, %c0_i32_0 : i32, i32
  }
  func.func @transform_3(%arg0: i32) -> (i32, i32) {
    %c0_i32 = arith.constant 0 : i32
    %c0_i32_0 = arith.constant 0 : i32
    return %arg0, %c0_i32 : i32, i32
  }
}

module attributes {stable_mosaic.version = 11 : i64} {
  func.func @_conv_stats_kernel(%arg0: i32, %arg1: memref<128x128xbf16, #tpu.memory_space<vmem>>, %arg2: memref<128x128xbf16, #tpu.memory_space<vmem>>, %arg3: memref<128x128xbf16, #tpu.memory_space<vmem>>, %arg4: memref<1x2x128xf32, #tpu.memory_space<vmem>>) attributes {dimension_semantics = [#tpu.dimension_semantics<parallel>], iteration_bounds = array<i64: 1>, scalar_prefetch = 0 : i64, scratch_operands = 0 : i64, tpu.core_type = #tpu.core_type<tc>, window_params = [{transform_indices = @transform_0, window_bounds = array<i64: 128, 128>}, {pipeline_mode = #tpu.pipeline_mode<synchronous>, transform_indices = @transform_1, window_bounds = array<i64: 128, 128>}, {transform_indices = @transform_2, window_bounds = array<i64: 128, 128>}, {transform_indices = @transform_3, window_bounds = array<i64: 1, 2, 128>}]} {
    %c0 = arith.constant 0 : index
    %c0_0 = arith.constant 0 : index
    %0 = vector.load %arg1[%c0, %c0_0] : memref<128x128xbf16, #tpu.memory_space<vmem>>, vector<128x128xbf16>
    %c0_1 = arith.constant 0 : index
    %c0_2 = arith.constant 0 : index
    %1 = vector.load %arg2[%c0_1, %c0_2] : memref<128x128xbf16, #tpu.memory_space<vmem>>, vector<128x128xbf16>
    %cst = arith.constant dense<0.000000e+00> : vector<128x128xf32>
    %2 = tpu.matmul %0, %1, %cst {dimension_numbers = #tpu.dot_dimension_numbers<[1], [0], [0], [1], [0, 0, 1, 1], [], []>} : vector<128x128xbf16>, vector<128x128xbf16>, vector<128x128xf32> -> vector<128x128xf32>
    %3 = arith.truncf %2 : vector<128x128xf32> to vector<128x128xbf16>
    %c0_3 = arith.constant 0 : index
    %c0_4 = arith.constant 0 : index
    %4 = vector.load %arg3[%c0_3, %c0_4] : memref<128x128xbf16, #tpu.memory_space<vmem>>, vector<128x128xbf16>
    tpu.vector_store %arg3[%c0_3, %c0_4], %3 {strides = array<i32>} : memref<128x128xbf16, #tpu.memory_space<vmem>>, vector<128x128xbf16>,
    %cst_5 = arith.constant dense<0.000000e+00> : vector<128xf32>
    %5 = vector.multi_reduction <add>, %2, %cst_5 [0] : vector<128x128xf32> to vector<128xf32>
    %6 = vector.shape_cast %5 : vector<128xf32> to vector<1x128xf32>
    %c0_6 = arith.constant 0 : index
    %c0_7 = arith.constant 0 : index
    %c0_8 = arith.constant 0 : index
    %7 = vector.load %arg4[%c0_6, %c0_7, %c0_8] : memref<1x2x128xf32, #tpu.memory_space<vmem>>, vector<1x1x128xf32>
    %8 = vector.shape_cast %7 : vector<1x1x128xf32> to vector<1x128xf32>
    %9 = vector.shape_cast %6 : vector<1x128xf32> to vector<1x1x128xf32>
    tpu.vector_store %arg4[%c0_6, %c0_7, %c0_8], %9 {strides = array<i32>} : memref<1x2x128xf32, #tpu.memory_space<vmem>>, vector<1x1x128xf32>,
    %10 = arith.mulf %2, %2 : vector<128x128xf32>
    %cst_9 = arith.constant dense<0.000000e+00> : vector<128xf32>
    %11 = vector.multi_reduction <add>, %10, %cst_9 [0] : vector<128x128xf32> to vector<128xf32>
    %12 = vector.shape_cast %11 : vector<128xf32> to vector<1x128xf32>
    %c0_10 = arith.constant 0 : index
    %c1 = arith.constant 1 : index
    %c0_11 = arith.constant 0 : index
    %13 = vector.load %arg4[%c0_10, %c1, %c0_11] : memref<1x2x128xf32, #tpu.memory_space<vmem>>, vector<1x1x128xf32>
    %14 = vector.shape_cast %13 : vector<1x1x128xf32> to vector<1x128xf32>
    %15 = vector.shape_cast %12 : vector<1x128xf32> to vector<1x1x128xf32>
    tpu.vector_store %arg4[%c0_10, %c1, %c0_11], %15 {strides = array<i32>} : memref<1x2x128xf32, #tpu.memory_space<vmem>>, vector<1x1x128xf32>,
    return
  }
  func.func @transform_0(%arg0: i32) -> (i32, i32) {
    %c0_i32 = arith.constant 0 : i32
    %c0_i32_0 = arith.constant 0 : i32
    return %arg0, %c0_i32 : i32, i32
  }
  func.func @transform_1(%arg0: i32) -> (i32, i32) {
    %c0_i32 = arith.constant 0 : i32
    %c0_i32_0 = arith.constant 0 : i32
    %c0_i32_1 = arith.constant 0 : i32
    return %c0_i32, %c0_i32_0 : i32, i32
  }
  func.func @transform_2(%arg0: i32) -> (i32, i32) {
    %c0_i32 = arith.constant 0 : i32
    %c0_i32_0 = arith.constant 0 : i32
    return %arg0, %c0_i32 : i32, i32
  }
  func.func @transform_3(%arg0: i32) -> (i32, i32, i32) {
    %c0_i32 = arith.constant 0 : i32
    %c0_i32_0 = arith.constant 0 : i32
    %c0_i32_1 = arith.constant 0 : i32
    return %arg0, %c0_i32, %c0_i32_0 : i32, i32, i32
  }
}

module attributes {stable_mosaic.version = 11 : i64} {
  func.func @_bn_lrelu_kernel(%arg0: i32, %arg1: memref<128x128xbf16, #tpu.memory_space<vmem>>, %arg2: memref<1x128xf32, #tpu.memory_space<vmem>>, %arg3: memref<1x128xf32, #tpu.memory_space<vmem>>, %arg4: memref<128x128xbf16, #tpu.memory_space<vmem>>) attributes {dimension_semantics = [#tpu.dimension_semantics<parallel>], iteration_bounds = array<i64: 1>, scalar_prefetch = 0 : i64, scratch_operands = 0 : i64, tpu.core_type = #tpu.core_type<tc>, window_params = [{transform_indices = @transform_0, window_bounds = array<i64: 128, 128>}, {pipeline_mode = #tpu.pipeline_mode<synchronous>, transform_indices = @transform_1, window_bounds = array<i64: 1, 128>}, {pipeline_mode = #tpu.pipeline_mode<synchronous>, transform_indices = @transform_2, window_bounds = array<i64: 1, 128>}, {transform_indices = @transform_3, window_bounds = array<i64: 128, 128>}]} {
    %c0 = arith.constant 0 : index
    %c0_0 = arith.constant 0 : index
    %0 = vector.load %arg1[%c0, %c0_0] : memref<128x128xbf16, #tpu.memory_space<vmem>>, vector<128x128xbf16>
    %1 = arith.extf %0 : vector<128x128xbf16> to vector<128x128xf32>
    %c0_1 = arith.constant 0 : index
    %c0_2 = arith.constant 0 : index
    %2 = vector.load %arg2[%c0_1, %c0_2] : memref<1x128xf32, #tpu.memory_space<vmem>>, vector<1x128xf32>
    %3 = vector.broadcast %2 : vector<1x128xf32> to vector<128x128xf32>
    %4 = arith.mulf %1, %3 : vector<128x128xf32>
    %c0_3 = arith.constant 0 : index
    %c0_4 = arith.constant 0 : index
    %5 = vector.load %arg3[%c0_3, %c0_4] : memref<1x128xf32, #tpu.memory_space<vmem>>, vector<1x128xf32>
    %6 = vector.broadcast %5 : vector<1x128xf32> to vector<128x128xf32>
    %7 = arith.addf %4, %6 : vector<128x128xf32>
    %cst = arith.constant 0.000000e+00 : f32
    %8 = vector.broadcast %cst : f32 to vector<128x128xf32>
    %9 = arith.cmpf ogt, %7, %8 : vector<128x128xf32>
    %cst_5 = arith.constant 2.000000e-01 : f32
    %10 = vector.broadcast %cst_5 : f32 to vector<128x128xf32>
    %11 = arith.mulf %10, %7 : vector<128x128xf32>
    %12 = arith.select %9, %7, %11 : vector<128x128xi1>, vector<128x128xf32>
    %13 = arith.truncf %12 : vector<128x128xf32> to vector<128x128xbf16>
    %c0_6 = arith.constant 0 : index
    %c0_7 = arith.constant 0 : index
    %14 = vector.load %arg4[%c0_6, %c0_7] : memref<128x128xbf16, #tpu.memory_space<vmem>>, vector<128x128xbf16>
    tpu.vector_store %arg4[%c0_6, %c0_7], %13 {strides = array<i32>} : memref<128x128xbf16, #tpu.memory_space<vmem>>, vector<128x128xbf16>,
    return
  }
  func.func @transform_0(%arg0: i32) -> (i32, i32) {
    %c0_i32 = arith.constant 0 : i32
    %c0_i32_0 = arith.constant 0 : i32
    return %arg0, %c0_i32 : i32, i32
  }
  func.func @transform_1(%arg0: i32) -> (i32, i32) {
    %c0_i32 = arith.constant 0 : i32
    %c0_i32_0 = arith.constant 0 : i32
    %c0_i32_1 = arith.constant 0 : i32
    return %c0_i32, %c0_i32_0 : i32, i32
  }
  func.func @transform_2(%arg0: i32) -> (i32, i32) {
    %c0_i32 = arith.constant 0 : i32
    %c0_i32_0 = arith.constant 0 : i32
    %c0_i32_1 = arith.constant 0 : i32
    return %c0_i32, %c0_i32_0 : i32, i32
  }
  func.func @transform_3(%arg0: i32) -> (i32, i32) {
    %c0_i32 = arith.constant 0 : i32
    %c0_i32_0 = arith.constant 0 : i32
    return %arg0, %c0_i32 : i32, i32
  }
}

module attributes {stable_mosaic.version = 11 : i64} {
  func.func @_conv_stats_kernel(%arg0: i32, %arg1: memref<32x256xbf16, #tpu.memory_space<vmem>>, %arg2: memref<256x128xbf16, #tpu.memory_space<vmem>>, %arg3: memref<32x128xbf16, #tpu.memory_space<vmem>>, %arg4: memref<1x2x128xf32, #tpu.memory_space<vmem>>) attributes {dimension_semantics = [#tpu.dimension_semantics<parallel>], iteration_bounds = array<i64: 1>, scalar_prefetch = 0 : i64, scratch_operands = 0 : i64, tpu.core_type = #tpu.core_type<tc>, window_params = [{transform_indices = @transform_0, window_bounds = array<i64: 32, 256>}, {pipeline_mode = #tpu.pipeline_mode<synchronous>, transform_indices = @transform_1, window_bounds = array<i64: 256, 128>}, {transform_indices = @transform_2, window_bounds = array<i64: 32, 128>}, {transform_indices = @transform_3, window_bounds = array<i64: 1, 2, 128>}]} {
    %c0 = arith.constant 0 : index
    %c0_0 = arith.constant 0 : index
    %0 = vector.load %arg1[%c0, %c0_0] : memref<32x256xbf16, #tpu.memory_space<vmem>>, vector<32x256xbf16>
    %c0_1 = arith.constant 0 : index
    %c0_2 = arith.constant 0 : index
    %1 = vector.load %arg2[%c0_1, %c0_2] : memref<256x128xbf16, #tpu.memory_space<vmem>>, vector<256x128xbf16>
    %cst = arith.constant dense<0.000000e+00> : vector<32x128xf32>
    %2 = tpu.matmul %0, %1, %cst {dimension_numbers = #tpu.dot_dimension_numbers<[1], [0], [0], [1], [0, 0, 1, 1], [], []>} : vector<32x256xbf16>, vector<256x128xbf16>, vector<32x128xf32> -> vector<32x128xf32>
    %3 = arith.truncf %2 : vector<32x128xf32> to vector<32x128xbf16>
    %c0_3 = arith.constant 0 : index
    %c0_4 = arith.constant 0 : index
    %4 = vector.load %arg3[%c0_3, %c0_4] : memref<32x128xbf16, #tpu.memory_space<vmem>>, vector<32x128xbf16>
    tpu.vector_store %arg3[%c0_3, %c0_4], %3 {strides = array<i32>} : memref<32x128xbf16, #tpu.memory_space<vmem>>, vector<32x128xbf16>,
    %cst_5 = arith.constant dense<0.000000e+00> : vector<128xf32>
    %5 = vector.multi_reduction <add>, %2, %cst_5 [0] : vector<32x128xf32> to vector<128xf32>
    %6 = vector.shape_cast %5 : vector<128xf32> to vector<1x128xf32>
    %c0_6 = arith.constant 0 : index
    %c0_7 = arith.constant 0 : index
    %c0_8 = arith.constant 0 : index
    %7 = vector.load %arg4[%c0_6, %c0_7, %c0_8] : memref<1x2x128xf32, #tpu.memory_space<vmem>>, vector<1x1x128xf32>
    %8 = vector.shape_cast %7 : vector<1x1x128xf32> to vector<1x128xf32>
    %9 = vector.shape_cast %6 : vector<1x128xf32> to vector<1x1x128xf32>
    tpu.vector_store %arg4[%c0_6, %c0_7, %c0_8], %9 {strides = array<i32>} : memref<1x2x128xf32, #tpu.memory_space<vmem>>, vector<1x1x128xf32>,
    %10 = arith.mulf %2, %2 : vector<32x128xf32>
    %cst_9 = arith.constant dense<0.000000e+00> : vector<128xf32>
    %11 = vector.multi_reduction <add>, %10, %cst_9 [0] : vector<32x128xf32> to vector<128xf32>
    %12 = vector.shape_cast %11 : vector<128xf32> to vector<1x128xf32>
    %c0_10 = arith.constant 0 : index
    %c1 = arith.constant 1 : index
    %c0_11 = arith.constant 0 : index
    %13 = vector.load %arg4[%c0_10, %c1, %c0_11] : memref<1x2x128xf32, #tpu.memory_space<vmem>>, vector<1x1x128xf32>
    %14 = vector.shape_cast %13 : vector<1x1x128xf32> to vector<1x128xf32>
    %15 = vector.shape_cast %12 : vector<1x128xf32> to vector<1x1x128xf32>
    tpu.vector_store %arg4[%c0_10, %c1, %c0_11], %15 {strides = array<i32>} : memref<1x2x128xf32, #tpu.memory_space<vmem>>, vector<1x1x128xf32>,
    return
  }
  func.func @transform_0(%arg0: i32) -> (i32, i32) {
    %c0_i32 = arith.constant 0 : i32
    %c0_i32_0 = arith.constant 0 : i32
    return %arg0, %c0_i32 : i32, i32
  }
  func.func @transform_1(%arg0: i32) -> (i32, i32) {
    %c0_i32 = arith.constant 0 : i32
    %c0_i32_0 = arith.constant 0 : i32
    %c0_i32_1 = arith.constant 0 : i32
    return %c0_i32, %c0_i32_0 : i32, i32
  }
  func.func @transform_2(%arg0: i32) -> (i32, i32) {
    %c0_i32 = arith.constant 0 : i32
    %c0_i32_0 = arith.constant 0 : i32
    return %arg0, %c0_i32 : i32, i32
  }
  func.func @transform_3(%arg0: i32) -> (i32, i32, i32) {
    %c0_i32 = arith.constant 0 : i32
    %c0_i32_0 = arith.constant 0 : i32
    %c0_i32_1 = arith.constant 0 : i32
    return %arg0, %c0_i32, %c0_i32_0 : i32, i32, i32
  }
}

module attributes {stable_mosaic.version = 11 : i64} {
  func.func @_bn_lrelu_kernel(%arg0: i32, %arg1: memref<32x128xbf16, #tpu.memory_space<vmem>>, %arg2: memref<1x128xf32, #tpu.memory_space<vmem>>, %arg3: memref<1x128xf32, #tpu.memory_space<vmem>>, %arg4: memref<32x128xbf16, #tpu.memory_space<vmem>>) attributes {dimension_semantics = [#tpu.dimension_semantics<parallel>], iteration_bounds = array<i64: 1>, scalar_prefetch = 0 : i64, scratch_operands = 0 : i64, tpu.core_type = #tpu.core_type<tc>, window_params = [{transform_indices = @transform_0, window_bounds = array<i64: 32, 128>}, {pipeline_mode = #tpu.pipeline_mode<synchronous>, transform_indices = @transform_1, window_bounds = array<i64: 1, 128>}, {pipeline_mode = #tpu.pipeline_mode<synchronous>, transform_indices = @transform_2, window_bounds = array<i64: 1, 128>}, {transform_indices = @transform_3, window_bounds = array<i64: 32, 128>}]} {
    %c0 = arith.constant 0 : index
    %c0_0 = arith.constant 0 : index
    %0 = vector.load %arg1[%c0, %c0_0] : memref<32x128xbf16, #tpu.memory_space<vmem>>, vector<32x128xbf16>
    %1 = arith.extf %0 : vector<32x128xbf16> to vector<32x128xf32>
    %c0_1 = arith.constant 0 : index
    %c0_2 = arith.constant 0 : index
    %2 = vector.load %arg2[%c0_1, %c0_2] : memref<1x128xf32, #tpu.memory_space<vmem>>, vector<1x128xf32>
    %3 = vector.broadcast %2 : vector<1x128xf32> to vector<32x128xf32>
    %4 = arith.mulf %1, %3 : vector<32x128xf32>
    %c0_3 = arith.constant 0 : index
    %c0_4 = arith.constant 0 : index
    %5 = vector.load %arg3[%c0_3, %c0_4] : memref<1x128xf32, #tpu.memory_space<vmem>>, vector<1x128xf32>
    %6 = vector.broadcast %5 : vector<1x128xf32> to vector<32x128xf32>
    %7 = arith.addf %4, %6 : vector<32x128xf32>
    %cst = arith.constant 0.000000e+00 : f32
    %8 = vector.broadcast %cst : f32 to vector<32x128xf32>
    %9 = arith.cmpf ogt, %7, %8 : vector<32x128xf32>
    %cst_5 = arith.constant 2.000000e-01 : f32
    %10 = vector.broadcast %cst_5 : f32 to vector<32x128xf32>
    %11 = arith.mulf %10, %7 : vector<32x128xf32>
    %12 = arith.select %9, %7, %11 : vector<32x128xi1>, vector<32x128xf32>
    %13 = arith.truncf %12 : vector<32x128xf32> to vector<32x128xbf16>
    %c0_6 = arith.constant 0 : index
    %c0_7 = arith.constant 0 : index
    %14 = vector.load %arg4[%c0_6, %c0_7] : memref<32x128xbf16, #tpu.memory_space<vmem>>, vector<32x128xbf16>
    tpu.vector_store %arg4[%c0_6, %c0_7], %13 {strides = array<i32>} : memref<32x128xbf16, #tpu.memory_space<vmem>>, vector<32x128xbf16>,
    return
  }
  func.func @transform_0(%arg0: i32) -> (i32, i32) {
    %c0_i32 = arith.constant 0 : i32
    %c0_i32_0 = arith.constant 0 : i32
    return %arg0, %c0_i32 : i32, i32
  }
  func.func @transform_1(%arg0: i32) -> (i32, i32) {
    %c0_i32 = arith.constant 0 : i32
    %c0_i32_0 = arith.constant 0 : i32
    %c0_i32_1 = arith.constant 0 : i32
    return %c0_i32, %c0_i32_0 : i32, i32
  }
  func.func @transform_2(%arg0: i32) -> (i32, i32) {
    %c0_i32 = arith.constant 0 : i32
    %c0_i32_0 = arith.constant 0 : i32
    %c0_i32_1 = arith.constant 0 : i32
    return %c0_i32, %c0_i32_0 : i32, i32
  }
  func.func @transform_3(%arg0: i32) -> (i32, i32) {
    %c0_i32 = arith.constant 0 : i32
    %c0_i32_0 = arith.constant 0 : i32
    return %arg0, %c0_i32 : i32, i32
  }
}

module attributes {stable_mosaic.version = 11 : i64} {
  func.func @_conv_stats_kernel(%arg0: i32, %arg1: memref<32x512xbf16, #tpu.memory_space<vmem>>, %arg2: memref<512x128xbf16, #tpu.memory_space<vmem>>, %arg3: memref<32x128xbf16, #tpu.memory_space<vmem>>, %arg4: memref<1x2x128xf32, #tpu.memory_space<vmem>>) attributes {dimension_semantics = [#tpu.dimension_semantics<parallel>], iteration_bounds = array<i64: 1>, scalar_prefetch = 0 : i64, scratch_operands = 0 : i64, tpu.core_type = #tpu.core_type<tc>, window_params = [{transform_indices = @transform_0, window_bounds = array<i64: 32, 512>}, {pipeline_mode = #tpu.pipeline_mode<synchronous>, transform_indices = @transform_1, window_bounds = array<i64: 512, 128>}, {transform_indices = @transform_2, window_bounds = array<i64: 32, 128>}, {transform_indices = @transform_3, window_bounds = array<i64: 1, 2, 128>}]} {
    %c0 = arith.constant 0 : index
    %c0_0 = arith.constant 0 : index
    %0 = vector.load %arg1[%c0, %c0_0] : memref<32x512xbf16, #tpu.memory_space<vmem>>, vector<32x512xbf16>
    %c0_1 = arith.constant 0 : index
    %c0_2 = arith.constant 0 : index
    %1 = vector.load %arg2[%c0_1, %c0_2] : memref<512x128xbf16, #tpu.memory_space<vmem>>, vector<512x128xbf16>
    %cst = arith.constant dense<0.000000e+00> : vector<32x128xf32>
    %2 = tpu.matmul %0, %1, %cst {dimension_numbers = #tpu.dot_dimension_numbers<[1], [0], [0], [1], [0, 0, 1, 1], [], []>} : vector<32x512xbf16>, vector<512x128xbf16>, vector<32x128xf32> -> vector<32x128xf32>
    %3 = arith.truncf %2 : vector<32x128xf32> to vector<32x128xbf16>
    %c0_3 = arith.constant 0 : index
    %c0_4 = arith.constant 0 : index
    %4 = vector.load %arg3[%c0_3, %c0_4] : memref<32x128xbf16, #tpu.memory_space<vmem>>, vector<32x128xbf16>
    tpu.vector_store %arg3[%c0_3, %c0_4], %3 {strides = array<i32>} : memref<32x128xbf16, #tpu.memory_space<vmem>>, vector<32x128xbf16>,
    %cst_5 = arith.constant dense<0.000000e+00> : vector<128xf32>
    %5 = vector.multi_reduction <add>, %2, %cst_5 [0] : vector<32x128xf32> to vector<128xf32>
    %6 = vector.shape_cast %5 : vector<128xf32> to vector<1x128xf32>
    %c0_6 = arith.constant 0 : index
    %c0_7 = arith.constant 0 : index
    %c0_8 = arith.constant 0 : index
    %7 = vector.load %arg4[%c0_6, %c0_7, %c0_8] : memref<1x2x128xf32, #tpu.memory_space<vmem>>, vector<1x1x128xf32>
    %8 = vector.shape_cast %7 : vector<1x1x128xf32> to vector<1x128xf32>
    %9 = vector.shape_cast %6 : vector<1x128xf32> to vector<1x1x128xf32>
    tpu.vector_store %arg4[%c0_6, %c0_7, %c0_8], %9 {strides = array<i32>} : memref<1x2x128xf32, #tpu.memory_space<vmem>>, vector<1x1x128xf32>,
    %10 = arith.mulf %2, %2 : vector<32x128xf32>
    %cst_9 = arith.constant dense<0.000000e+00> : vector<128xf32>
    %11 = vector.multi_reduction <add>, %10, %cst_9 [0] : vector<32x128xf32> to vector<128xf32>
    %12 = vector.shape_cast %11 : vector<128xf32> to vector<1x128xf32>
    %c0_10 = arith.constant 0 : index
    %c1 = arith.constant 1 : index
    %c0_11 = arith.constant 0 : index
    %13 = vector.load %arg4[%c0_10, %c1, %c0_11] : memref<1x2x128xf32, #tpu.memory_space<vmem>>, vector<1x1x128xf32>
    %14 = vector.shape_cast %13 : vector<1x1x128xf32> to vector<1x128xf32>
    %15 = vector.shape_cast %12 : vector<1x128xf32> to vector<1x1x128xf32>
    tpu.vector_store %arg4[%c0_10, %c1, %c0_11], %15 {strides = array<i32>} : memref<1x2x128xf32, #tpu.memory_space<vmem>>, vector<1x1x128xf32>,
    return
  }
  func.func @transform_0(%arg0: i32) -> (i32, i32) {
    %c0_i32 = arith.constant 0 : i32
    %c0_i32_0 = arith.constant 0 : i32
    return %arg0, %c0_i32 : i32, i32
  }
  func.func @transform_1(%arg0: i32) -> (i32, i32) {
    %c0_i32 = arith.constant 0 : i32
    %c0_i32_0 = arith.constant 0 : i32
    %c0_i32_1 = arith.constant 0 : i32
    return %c0_i32, %c0_i32_0 : i32, i32
  }
  func.func @transform_2(%arg0: i32) -> (i32, i32) {
    %c0_i32 = arith.constant 0 : i32
    %c0_i32_0 = arith.constant 0 : i32
    return %arg0, %c0_i32 : i32, i32
  }
  func.func @transform_3(%arg0: i32) -> (i32, i32, i32) {
    %c0_i32 = arith.constant 0 : i32
    %c0_i32_0 = arith.constant 0 : i32
    %c0_i32_1 = arith.constant 0 : i32
    return %arg0, %c0_i32, %c0_i32_0 : i32, i32, i32
  }
}

module attributes {stable_mosaic.version = 11 : i64} {
  func.func @kernel(%arg0: i32, %arg1: memref<16x1024xbf16, #tpu.memory_space<vmem>>, %arg2: memref<1024x128xbf16, #tpu.memory_space<vmem>>, %arg3: memref<1x128xf32, #tpu.memory_space<vmem>>, %arg4: memref<16x128xf32, #tpu.memory_space<vmem>>) attributes {dimension_semantics = [#tpu.dimension_semantics<parallel>], iteration_bounds = array<i64: 1>, scalar_prefetch = 0 : i64, scratch_operands = 0 : i64, tpu.core_type = #tpu.core_type<tc>, window_params = [{transform_indices = @transform_0, window_bounds = array<i64: 16, 1024>}, {pipeline_mode = #tpu.pipeline_mode<synchronous>, transform_indices = @transform_1, window_bounds = array<i64: 1024, 128>}, {pipeline_mode = #tpu.pipeline_mode<synchronous>, transform_indices = @transform_2, window_bounds = array<i64: 1, 128>}, {transform_indices = @transform_3, window_bounds = array<i64: 16, 128>}]} {
    %c0 = arith.constant 0 : index
    %c0_0 = arith.constant 0 : index
    %0 = vector.load %arg1[%c0, %c0_0] : memref<16x1024xbf16, #tpu.memory_space<vmem>>, vector<16x1024xbf16>
    %c0_1 = arith.constant 0 : index
    %c0_2 = arith.constant 0 : index
    %1 = vector.load %arg2[%c0_1, %c0_2] : memref<1024x128xbf16, #tpu.memory_space<vmem>>, vector<1024x128xbf16>
    %cst = arith.constant dense<0.000000e+00> : vector<16x128xf32>
    %2 = tpu.matmul %0, %1, %cst {dimension_numbers = #tpu.dot_dimension_numbers<[1], [0], [0], [1], [0, 0, 1, 1], [], []>} : vector<16x1024xbf16>, vector<1024x128xbf16>, vector<16x128xf32> -> vector<16x128xf32>
    %c0_3 = arith.constant 0 : index
    %c0_4 = arith.constant 0 : index
    %3 = vector.load %arg3[%c0_3, %c0_4] : memref<1x128xf32, #tpu.memory_space<vmem>>, vector<1x128xf32>
    %4 = vector.broadcast %3 : vector<1x128xf32> to vector<16x128xf32>
    %5 = arith.addf %2, %4 : vector<16x128xf32>
    %c0_5 = arith.constant 0 : index
    %c0_6 = arith.constant 0 : index
    %6 = vector.load %arg4[%c0_5, %c0_6] : memref<16x128xf32, #tpu.memory_space<vmem>>, vector<16x128xf32>
    tpu.vector_store %arg4[%c0_5, %c0_6], %5 {strides = array<i32>} : memref<16x128xf32, #tpu.memory_space<vmem>>, vector<16x128xf32>,
    return
  }
  func.func @transform_0(%arg0: i32) -> (i32, i32) {
    %c0_i32 = arith.constant 0 : i32
    %c0_i32_0 = arith.constant 0 : i32
    return %arg0, %c0_i32 : i32, i32
  }
  func.func @transform_1(%arg0: i32) -> (i32, i32) {
    %c0_i32 = arith.constant 0 : i32
    %c0_i32_0 = arith.constant 0 : i32
    %c0_i32_1 = arith.constant 0 : i32
    return %c0_i32, %c0_i32_0 : i32, i32
  }
  func.func @transform_2(%arg0: i32) -> (i32, i32) {
    %c0_i32 = arith.constant 0 : i32
    %c0_i32_0 = arith.constant 0 : i32
    %c0_i32_1 = arith.constant 0 : i32
    return %c0_i32, %c0_i32_0 : i32, i32
  }
  func.func @transform_3(%arg0: i32) -> (i32, i32) {
    %c0_i32 = arith.constant 0 : i32
    %c0_i32_0 = arith.constant 0 : i32
    return %arg0, %c0_i32 : i32, i32
  }
}

</mosaic_0001>

<llo_original>
// kernel: _lambda_.8
$region0: #{_lambda_.8}
  #allocation0 [shape = 'u32[]', space=smem, size = 0x4, offset = 0x4, fixed_abs, tag = 'smem constant byte address 0x4 - core index']
  #allocation1 [shape = 'u32[72,128]{1,0:T(1,128)}', space=vmem, size = 0x9000, scoped, tag = 'internal scratch']
  %s0 = inlined_call_operand.vmem [shape: bf16[512,48], index: 0, kind: input, shape index: {}]
  %s1 = inlined_call_operand.vmem [shape: bf16[48,128], index: 1, kind: input, shape index: {}]
  %s2 = inlined_call_operand.vmem [shape: f32[1,128], index: 2, kind: input, shape index: {}]
  %s3 = inlined_call_operand.vmem [shape: bf16[512,128], index: 3, kind: output, shape index: {}]
  %s4 = sld [smem:[#allocation0]]
  $region22: #{_lambda_.8} parent=0
    _
  %s6 = ssub.s32 1, %s4
  %s7 = scalar_select 0, %s6, %s4
  // Predicated region
  $region2: #{_lambda_.8} parent=0 // pred_check
    _
  $region3: #{_lambda_.8} parent=0 // pred_check_branch
    %9 = sbr.rel (0) target = $region5
  $region4: #{_lambda_.8} parent=0 // pred_region
    _
  $region5: #{_lambda_.8} parent=0 // pred_fallthru
    _
  // Predicated region
  $region6: #{_lambda_.8} parent=0 // pred_check
    _
  $region7: #{_lambda_.8} parent=0 // pred_check_branch
    %11 = sbr.rel (0) target = $region9
  $region8: #{_lambda_.8} parent=0 // pred_region
    _
  $region9: #{_lambda_.8} parent=0 // pred_fallthru
    _
  // Predicated region
  $region10: #{_lambda_.8} parent=0 // pred_check
    _
  $region11: #{_lambda_.8} parent=0 // pred_check_branch
    %13 = sbr.rel (0) target = $region13
  $region12: #{_lambda_.8} parent=0 // pred_region
    _
  $region13: #{_lambda_.8} parent=0 // pred_fallthru
    _
  %v15 = vld [vmem:[%s0] sm:$0xf]
  %v16 = vld [vmem:[%s0 + $0x4] sm:$0xf]
  %v17 = vld [vmem:[%s0 + $0x8] sm:$0xf]
  %v18 = vld [vmem:[%s0 + $0xc] sm:$0xf]
  %v19 = vld [vmem:[%s0 + $0x10] sm:$0xf]
  %v20 = vld [vmem:[%s0 + $0x14] sm:$0xf]
  %v21 = vld [vmem:[%s0 + $0x18] sm:$0xf]
  %v22 = vld [vmem:[%s0 + $0x1c] sm:$0xf]
  %v23 = vld [vmem:[%s0 + $0x20] sm:$0xf]
  %v24 = vld [vmem:[%s0 + $0x24] sm:$0xf]
  %v25 = vld [vmem:[%s0 + $0x28] sm:$0xf]
  %v26 = vld [vmem:[%s0 + $0x2c] sm:$0xf]
  %v27 = vld [vmem:[%s0 + $0x30] sm:$0xf]
  %v28 = vld [vmem:[%s0 + $0x34] sm:$0xf]
  %v29 = vld [vmem:[%s0 + $0x38] sm:$0xf]
  %v30 = vld [vmem:[%s0 + $0x3c] sm:$0xf]
  %v31 = vld [vmem:[%s0 + $0x40] sm:$0xf]
  %v32 = vld [vmem:[%s0 + $0x44] sm:$0xf]
  %v33 = vld [vmem:[%s0 + $0x48] sm:$0xf]
  %v34 = vld [vmem:[%s0 + $0x4c] sm:$0xf]
  %v35 = vld [vmem:[%s0 + $0x50] sm:$0xf]
  %v36 = vld [vmem:[%s0 + $0x54] sm:$0xf]
  %v37 = vld [vmem:[%s0 + $0x58] sm:$0xf]
  %v38 = vld [vmem:[%s0 + $0x5c] sm:$0xf]
  %v39 = vld [vmem:[%s0 + $0x60] sm:$0xf]
  %v40 = vld [vmem:[%s0 + $0x64] sm:$0xf]
  %v41 = vld [vmem:[%s0 + $0x68] sm:$0xf]
  %v42 = vld [vmem:[%s0 + $0x6c] sm:$0xf]
  %v43 = vld [vmem:[%s0 + $0x70] sm:$0xf]
  %v44 = vld [vmem:[%s0 + $0x74] sm:$0xf]
  %v45 = vld [vmem:[%s0 + $0x78] sm:$0xf]
  %v46 = vld [vmem:[%s0 + $0x7c] sm:$0xf]
  %v47 = vld [vmem:[%s0 + $0x80] sm:$0xf]
  %v48 = vld [vmem:[%s0 + $0x84] sm:$0xf]
  %v49 = vld [vmem:[%s0 + $0x88] sm:$0xf]
  %v50 = vld [vmem:[%s0 + $0x8c] sm:$0xf]
  %v51 = vld [vmem:[%s0 + $0x90] sm:$0xf]
  %v52 = vld [vmem:[%s0 + $0x94] sm:$0xf]
  %v53 = vld [vmem:[%s0 + $0x98] sm:$0xf]
  %v54 = vld [vmem:[%s0 + $0x9c] sm:$0xf]
  %v55 = vld [vmem:[%s0 + $0xa0] sm:$0xf]
  %v56 = vld [vmem:[%s0 + $0xa4] sm:$0xf]
  %v57 = vld [vmem:[%s0 + $0xa8] sm:$0xf]
  %v58 = vld [vmem:[%s0 + $0xac] sm:$0xf]
  %v59 = vld [vmem:[%s0 + $0xb0] sm:$0xf]
  %v60 = vld [vmem:[%s0 + $0xb4] sm:$0xf]
  %v61 = vld [vmem:[%s0 + $0xb8] sm:$0xf]
  %v62 = vld [vmem:[%s0 + $0xbc] sm:$0xf]
  %v63 = vld [vmem:[%s0 + $0xc0] sm:$0xf]
  %v64 = vld [vmem:[%s0 + $0xc4] sm:$0xf]
  %v65 = vld [vmem:[%s0 + $0xc8] sm:$0xf]
  %v66 = vld [vmem:[%s0 + $0xcc] sm:$0xf]
  %v67 = vld [vmem:[%s0 + $0xd0] sm:$0xf]
  %v68 = vld [vmem:[%s0 + $0xd4] sm:$0xf]
  %v69 = vld [vmem:[%s0 + $0xd8] sm:$0xf]
  %v70 = vld [vmem:[%s0 + $0xdc] sm:$0xf]
  %v71 = vld [vmem:[%s0 + $0xe0] sm:$0xf]
  %v72 = vld [vmem:[%s0 + $0xe4] sm:$0xf]
  %v73 = vld [vmem:[%s0 + $0xe8] sm:$0xf]
  %v74 = vld [vmem:[%s0 + $0xec] sm:$0xf]
  %v75 = vld [vmem:[%s0 + $0xf0] sm:$0xf]
  %v76 = vld [vmem:[%s0 + $0xf4] sm:$0xf]
  %v77 = vld [vmem:[%s0 + $0xf8] sm:$0xf]
  %v78 = vld [vmem:[%s0 + $0xfc] sm:$0xf]
  %v79 = vld [vmem:[%s1] sm:$0xf]
  %v80 = vld [vmem:[%s1 + $0x4] sm:$0xf]
  %v81 = vld [vmem:[%s1 + $0x8] sm:$0xf]
  %v82 = vld [vmem:[%s1 + $0xc] sm:$0xf]
  %v83 = vld [vmem:[%s1 + $0x10] sm:$0xf]
  %v84 = vld [vmem:[%s1 + $0x14] sm:$0xf]
  %v85 = vld [vmem:[%s2] sm:$0x1]
  %v87 = vperm.slane %v85, 0
  %v153 = vunpack.c.l.b16 %v15
  %v154 = vunpack.c.l.b16 %v16
  %v155 = vunpack.c.l.b16 %v17
  %v156 = vunpack.c.l.b16 %v18
  %v157 = vunpack.c.l.b16 %v19
  %v158 = vunpack.c.l.b16 %v20
  %v159 = vunpack.c.l.b16 %v21
  %v160 = vunpack.c.l.b16 %v22
  %v161 = vunpack.c.l.b16 %v23
  %v162 = vunpack.c.l.b16 %v24
  %v163 = vunpack.c.l.b16 %v25
  %v164 = vunpack.c.l.b16 %v26
  %v165 = vunpack.c.l.b16 %v27
  %v166 = vunpack.c.l.b16 %v28
  %v167 = vunpack.c.l.b16 %v29
  %v168 = vunpack.c.l.b16 %v30
  %v169 = vunpack.c.l.b16 %v31
  %v170 = vunpack.c.l.b16 %v32
  %v171 = vunpack.c.l.b16 %v33
  %v172 = vunpack.c.l.b16 %v34
  %v173 = vunpack.c.l.b16 %v35
  %v174 = vunpack.c.l.b16 %v36
  %v175 = vunpack.c.l.b16 %v37
  %v176 = vunpack.c.l.b16 %v38
  %v177 = vunpack.c.l.b16 %v39
  %v178 = vunpack.c.l.b16 %v40
  %v179 = vunpack.c.l.b16 %v41
  %v180 = vunpack.c.l.b16 %v42
  %v181 = vunpack.c.l.b16 %v43
  %v182 = vunpack.c.l.b16 %v44
  %v183 = vunpack.c.l.b16 %v45
  %v184 = vunpack.c.l.b16 %v46
  %v185 = vunpack.c.l.b16 %v47
  %v186 = vunpack.c.l.b16 %v48
  %v187 = vunpack.c.l.b16 %v49
  %v188 = vunpack.c.l.b16 %v50
  %v189 = vunpack.c.l.b16 %v51
  %v190 = vunpack.c.l.b16 %v52
  %v191 = vunpack.c.l.b16 %v53
  %v192 = vunpack.c.l.b16 %v54
  %v193 = vunpack.c.l.b16 %v55
  %v194 = vunpack.c.l.b16 %v56
  %v195 = vunpack.c.l.b16 %v57
  %v196 = vunpack.c.l.b16 %v58
  %v197 = vunpack.c.l.b16 %v59
  %v198 = vunpack.c.l.b16 %v60
  %v199 = vunpack.c.l.b16 %v61
  %v200 = vunpack.c.l.b16 %v62
  %v201 = vunpack.c.l.b16 %v63
  %v202 = vunpack.c.l.b16 %v64
  %v203 = vunpack.c.l.b16 %v65
  %v204 = vunpack.c.l.b16 %v66
  %v205 = vunpack.c.l.b16 %v67
  %v206 = vunpack.c.l.b16 %v68
  %v207 = vunpack.c.l.b16 %v69
  %v208 = vunpack.c.l.b16 %v70
  %v209 = vunpack.c.l.b16 %v71
  %v210 = vunpack.c.l.b16 %v72
  %v211 = vunpack.c.l.b16 %v73
  %v212 = vunpack.c.l.b16 %v74
  %v213 = vunpack.c.l.b16 %v75
  %v214 = vunpack.c.l.b16 %v76
  %v215 = vunpack.c.l.b16 %v77
  %v216 = vunpack.c.l.b16 %v78
  %v217 = vpack.c.b16 %v154, %v153
  %v218 = vpack.c.b16 %v156, %v155
  %v219 = vpack.c.b16 %v158, %v157
  %v220 = vpack.c.b16 %v160, %v159
  %v221 = vpack.c.b16 %v162, %v161
  %v222 = vpack.c.b16 %v164, %v163
  %v223 = vpack.c.b16 %v166, %v165
  %v224 = vpack.c.b16 %v168, %v167
  %v225 = vpack.c.b16 %v170, %v169
  %v226 = vpack.c.b16 %v172, %v171
  %v227 = vpack.c.b16 %v174, %v173
  %v228 = vpack.c.b16 %v176, %v175
  %v229 = vpack.c.b16 %v178, %v177
  %v230 = vpack.c.b16 %v180, %v179
  %v231 = vpack.c.b16 %v182, %v181
  %v232 = vpack.c.b16 %v184, %v183
  %v233 = vpack.c.b16 %v186, %v185
  %v234 = vpack.c.b16 %v188, %v187
  %v235 = vpack.c.b16 %v190, %v189
  %v236 = vpack.c.b16 %v192, %v191
  %v237 = vpack.c.b16 %v194, %v193
  %v238 = vpack.c.b16 %v196, %v195
  %v239 = vpack.c.b16 %v198, %v197
  %v240 = vpack.c.b16 %v200, %v199
  %v241 = vpack.c.b16 %v202, %v201
  %v242 = vpack.c.b16 %v204, %v203
  %v243 = vpack.c.b16 %v206, %v205
  %v244 = vpack.c.b16 %v208, %v207
  %v245 = vpack.c.b16 %v210, %v209
  %v246 = vpack.c.b16 %v212, %v211
  %v247 = vpack.c.b16 %v214, %v213
  %v248 = vpack.c.b16 %v216, %v215
  %v255 = vunpack.c.l.b16 %v79
  %v256 = vunpack.c.l.b16 %v80
  %v257 = vunpack.c.l.b16 %v81
  %v258 = vunpack.c.l.b16 %v82
  %v259 = vunpack.c.l.b16 %v83
  %v260 = vunpack.c.l.b16 %v84
  %v261 = vpack.c.b16 %v256, %v255
  %v262 = vpack.c.b16 %v258, %v257
  %v263 = vpack.c.b16 %v260, %v259
  %vm267 = vcmask 392192
  %v269 = vsel %vm267, %v217, 0
  %v272 = vsel %vm267, %v218, 0
  %v275 = vsel %vm267, %v219, 0
  %v278 = vsel %vm267, %v220, 0
  %v281 = vsel %vm267, %v221, 0
  %v284 = vsel %vm267, %v222, 0
  %v287 = vsel %vm267, %v223, 0
  %v290 = vsel %vm267, %v224, 0
  %v293 = vsel %vm267, %v225, 0
  %v296 = vsel %vm267, %v226, 0
  %v299 = vsel %vm267, %v227, 0
  %v302 = vsel %vm267, %v228, 0
  %v305 = vsel %vm267, %v229, 0
  %v308 = vsel %vm267, %v230, 0
  %v311 = vsel %vm267, %v231, 0
  %v314 = vsel %vm267, %v232, 0
  %v317 = vsel %vm267, %v233, 0
  %v320 = vsel %vm267, %v234, 0
  %v323 = vsel %vm267, %v235, 0
  %v326 = vsel %vm267, %v236, 0
  %v329 = vsel %vm267, %v237, 0
  %v332 = vsel %vm267, %v238, 0
  %v335 = vsel %vm267, %v239, 0
  %v338 = vsel %vm267, %v240, 0
  %v341 = vsel %vm267, %v241, 0
  %v344 = vsel %vm267, %v242, 0
  %v347 = vsel %vm267, %v243, 0
  %v350 = vsel %vm267, %v244, 0
  %v353 = vsel %vm267, %v245, 0
  %v356 = vsel %vm267, %v246, 0
  %v359 = vsel %vm267, %v247, 0
  %v362 = vsel %vm267, %v248, 0
  %364 = vmatpush.bf16.msra.mxu0 0
  %365 = vmatpush.bf16.msra.mxu0 0
  %366 = vmatpush.bf16.msra.mxu0 0
  %367 = vmatpush.bf16.msra.mxu0 0
  %368 = vmatpush.bf16.msra.mxu0 0
  %369 = vmatpush.bf16.msra.mxu0 %v263
  %370 = vmatpush.bf16.msra.mxu0 %v262
  %371 = vmatpush.bf16.msra.mxu0 %v261
  %372 = vmatmul.bf16.gmra.mxu0 %v269
  %v373 = vpop.f32.mrf.mxu0
  %v374 = vadd.f32 %v87, %v373
  %v375 = vpop.f32.mrf.mxu0
  %v376 = vadd.f32 %v87, %v375
  %377 = vmatmul.bf16.gmra.mxu0 %v272
  %v378 = vpop.f32.mrf.mxu0
  %v379 = vadd.f32 %v87, %v378
  %v380 = vpop.f32.mrf.mxu0
  %v381 = vadd.f32 %v87, %v380
  %382 = vmatmul.bf16.gmra.mxu0 %v275
  %v383 = vpop.f32.mrf.mxu0
  %v384 = vadd.f32 %v87, %v383
  %v385 = vpop.f32.mrf.mxu0
  %v386 = vadd.f32 %v87, %v385
  %387 = vmatmul.bf16.gmra.mxu0 %v278
  %v388 = vpop.f32.mrf.mxu0
  %v389 = vadd.f32 %v87, %v388
  %v390 = vpop.f32.mrf.mxu0
  %v391 = vadd.f32 %v87, %v390
  %392 = vmatmul.bf16.gmra.mxu0 %v281
  %v393 = vpop.f32.mrf.mxu0
  %v394 = vadd.f32 %v87, %v393
  %v395 = vpop.f32.mrf.mxu0
  %v396 = vadd.f32 %v87, %v395
  %397 = vmatmul.bf16.gmra.mxu0 %v284
  %v398 = vpop.f32.mrf.mxu0
  %v399 = vadd.f32 %v87, %v398
  %v400 = vpop.f32.mrf.mxu0
  %v401 = vadd.f32 %v87, %v400
  %402 = vmatmul.bf16.gmra.mxu0 %v287
  %v403 = vpop.f32.mrf.mxu0
  %v404 = vadd.f32 %v87, %v403
  %v405 = vpop.f32.mrf.mxu0
  %v406 = vadd.f32 %v87, %v405
  %407 = vmatmul.bf16.gmra.mxu0 %v290
  %v408 = vpop.f32.mrf.mxu0
  %v409 = vadd.f32 %v87, %v408
  %v410 = vpop.f32.mrf.mxu0
  %v411 = vadd.f32 %v87, %v410
  %412 = vmatmul.bf16.gmra.mxu0 %v293
  %v413 = vpop.f32.mrf.mxu0
  %v414 = vadd.f32 %v87, %v413
  %v415 = vpop.f32.mrf.mxu0
  %v416 = vadd.f32 %v87, %v415
  %417 = vmatmul.bf16.gmra.mxu0 %v296
  %v418 = vpop.f32.mrf.mxu0
  %v419 = vadd.f32 %v87, %v418
  %v420 = vpop.f32.mrf.mxu0
  %v421 = vadd.f32 %v87, %v420
  %422 = vmatmul.bf16.gmra.mxu0 %v299
  %v423 = vpop.f32.mrf.mxu0
  %v424 = vadd.f32 %v87, %v423
  %v425 = vpop.f32.mrf.mxu0
  %v426 = vadd.f32 %v87, %v425
  %427 = vmatmul.bf16.gmra.mxu0 %v302
  %v428 = vpop.f32.mrf.mxu0
  %v429 = vadd.f32 %v87, %v428
  %v430 = vpop.f32.mrf.mxu0
  %v431 = vadd.f32 %v87, %v430
  %432 = vmatmul.bf16.gmra.mxu0 %v305
  %v433 = vpop.f32.mrf.mxu0
  %v434 = vadd.f32 %v87, %v433
  %v435 = vpop.f32.mrf.mxu0
  %v436 = vadd.f32 %v87, %v435
  %437 = vmatmul.bf16.gmra.mxu0 %v308
  %v438 = vpop.f32.mrf.mxu0
  %v439 = vadd.f32 %v87, %v438
  %v440 = vpop.f32.mrf.mxu0
  %v441 = vadd.f32 %v87, %v440
  %442 = vmatmul.bf16.gmra.mxu0 %v311
  %v443 = vpop.f32.mrf.mxu0
  %v444 = vadd.f32 %v87, %v443
  %v445 = vpop.f32.mrf.mxu0
  %v446 = vadd.f32 %v87, %v445
  %447 = vmatmul.bf16.gmra.mxu0 %v314
  %v448 = vpop.f32.mrf.mxu0
  %v449 = vadd.f32 %v87, %v448
  %v450 = vpop.f32.mrf.mxu0
  %v451 = vadd.f32 %v87, %v450
  %452 = vmatmul.bf16.gmra.mxu0 %v317
  %v453 = vpop.f32.mrf.mxu0
  %v454 = vadd.f32 %v87, %v453
  %v455 = vpop.f32.mrf.mxu0
  %v456 = vadd.f32 %v87, %v455
  %457 = vmatmul.bf16.gmra.mxu0 %v320
  %v458 = vpop.f32.mrf.mxu0
  %v459 = vadd.f32 %v87, %v458
  %v460 = vpop.f32.mrf.mxu0
  %v461 = vadd.f32 %v87, %v460
  %462 = vmatmul.bf16.gmra.mxu0 %v323
  %v463 = vpop.f32.mrf.mxu0
  %v464 = vadd.f32 %v87, %v463
  %v465 = vpop.f32.mrf.mxu0
  %v466 = vadd.f32 %v87, %v465
  %467 = vmatmul.bf16.gmra.mxu0 %v326
  %v468 = vpop.f32.mrf.mxu0
  %v469 = vadd.f32 %v87, %v468
  %v470 = vpop.f32.mrf.mxu0
  %v471 = vadd.f32 %v87, %v470
  %472 = vmatmul.bf16.gmra.mxu0 %v329
  %v473 = vpop.f32.mrf.mxu0
  %v474 = vadd.f32 %v87, %v473
  %v475 = vpop.f32.mrf.mxu0
  %v476 = vadd.f32 %v87, %v475
  %477 = vmatmul.bf16.gmra.mxu0 %v332
  %v478 = vpop.f32.mrf.mxu0
  %v479 = vadd.f32 %v87, %v478
  %v480 = vpop.f32.mrf.mxu0
  %v481 = vadd.f32 %v87, %v480
  %482 = vmatmul.bf16.gmra.mxu0 %v335
  %v483 = vpop.f32.mrf.mxu0
  %v484 = vadd.f32 %v87, %v483
  %v485 = vpop.f32.mrf.mxu0
  %v486 = vadd.f32 %v87, %v485
  %487 = vmatmul.bf16.gmra.mxu0 %v338
  %v488 = vpop.f32.mrf.mxu0
  %v489 = vadd.f32 %v87, %v488
  %v490 = vpop.f32.mrf.mxu0
  %v491 = vadd.f32 %v87, %v490
  %492 = vmatmul.bf16.gmra.mxu0 %v341
  %v493 = vpop.f32.mrf.mxu0
  %v494 = vadd.f32 %v87, %v493
  %v495 = vpop.f32.mrf.mxu0
  %v496 = vadd.f32 %v87, %v495
  %497 = vmatmul.bf16.gmra.mxu0 %v344
  %v498 = vpop.f32.mrf.mxu0
  %v499 = vadd.f32 %v87, %v498
  %v500 = vpop.f32.mrf.mxu0
  %v501 = vadd.f32 %v87, %v500
  %502 = vmatmul.bf16.gmra.mxu0 %v347
  %v503 = vpop.f32.mrf.mxu0
  %v504 = vadd.f32 %v87, %v503
  %v505 = vpop.f32.mrf.mxu0
  %v506 = vadd.f32 %v87, %v505
  %507 = vmatmul.bf16.gmra.mxu0 %v350
  %v508 = vpop.f32.mrf.mxu0
  %v509 = vadd.f32 %v87, %v508
  %v510 = vpop.f32.mrf.mxu0
  %v511 = vadd.f32 %v87, %v510
  %512 = vmatmul.bf16.gmra.mxu0 %v353
  %v513 = vpop.f32.mrf.mxu0
  %v514 = vadd.f32 %v87, %v513
  %v515 = vpop.f32.mrf.mxu0
  %v516 = vadd.f32 %v87, %v515
  %517 = vmatmul.bf16.gmra.mxu0 %v356
  %v518 = vpop.f32.mrf.mxu0
  %v519 = vadd.f32 %v87, %v518
  %v520 = vpop.f32.mrf.mxu0
  %v521 = vadd.f32 %v87, %v520
  %522 = vmatmul.bf16.gmra.mxu0 %v359
  %v523 = vpop.f32.mrf.mxu0
  %v524 = vadd.f32 %v87, %v523
  %v525 = vpop.f32.mrf.mxu0
  %v526 = vadd.f32 %v87, %v525
  %527 = vmatmul.bf16.gmra.mxu0 %v362
  %v528 = vpop.f32.mrf.mxu0
  %v529 = vadd.f32 %v87, %v528
  %v530 = vpop.f32.mrf.mxu0
  %v531 = vadd.f32 %v87, %v530
  %532 = vdwg.mxu0
  %vm533 = vcmp.gt.f32.partialorder %v374, 0.0
  %vm534 = vcmp.gt.f32.partialorder %v376, 0.0
  %vm535 = vcmp.gt.f32.partialorder %v379, 0.0
  %vm536 = vcmp.gt.f32.partialorder %v381, 0.0
  %vm537 = vcmp.gt.f32.partialorder %v384, 0.0
  %vm538 = vcmp.gt.f32.partialorder %v386, 0.0
  %vm539 = vcmp.gt.f32.partialorder %v389, 0.0
  %vm540 = vcmp.gt.f32.partialorder %v391, 0.0
  %vm541 = vcmp.gt.f32.partialorder %v394, 0.0
  %vm542 = vcmp.gt.f32.partialorder %v396, 0.0
  %vm543 = vcmp.gt.f32.partialorder %v399, 0.0
  %vm544 = vcmp.gt.f32.partialorder %v401, 0.0
  %vm545 = vcmp.gt.f32.partialorder %v404, 0.0
  %vm546 = vcmp.gt.f32.partialorder %v406, 0.0
  %vm547 = vcmp.gt.f32.partialorder %v409, 0.0
  %vm548 = vcmp.gt.f32.partialorder %v411, 0.0
  %vm549 = vcmp.gt.f32.partialorder %v414, 0.0
  %vm550 = vcmp.gt.f32.partialorder %v416, 0.0
  %vm551 = vcmp.gt.f32.partialorder %v419, 0.0
  %vm552 = vcmp.gt.f32.partialorder %v421, 0.0
  %vm553 = vcmp.gt.f32.partialorder %v424, 0.0
  %vm554 = vcmp.gt.f32.partialorder %v426, 0.0
  %vm555 = vcmp.gt.f32.partialorder %v429, 0.0
  %vm556 = vcmp.gt.f32.partialorder %v431, 0.0
  %vm557 = vcmp.gt.f32.partialorder %v434, 0.0
  %vm558 = vcmp.gt.f32.partialorder %v436, 0.0
  %vm559 = vcmp.gt.f32.partialorder %v439, 0.0
  %vm560 = vcmp.gt.f32.partialorder %v441, 0.0
  %vm561 = vcmp.gt.f32.partialorder %v444, 0.0
  %vm562 = vcmp.gt.f32.partialorder %v446, 0.0
  %vm563 = vcmp.gt.f32.partialorder %v449, 0.0
  %vm564 = vcmp.gt.f32.partialorder %v451, 0.0
  %vm565 = vcmp.gt.f32.partialorder %v454, 0.0
  %vm566 = vcmp.gt.f32.partialorder %v456, 0.0
  %vm567 = vcmp.gt.f32.partialorder %v459, 0.0
  %vm568 = vcmp.gt.f32.partialorder %v461, 0.0
  %vm569 = vcmp.gt.f32.partialorder %v464, 0.0
  %vm570 = vcmp.gt.f32.partialorder %v466, 0.0
  %vm571 = vcmp.gt.f32.partialorder %v469, 0.0
  %vm572 = vcmp.gt.f32.partialorder %v471, 0.0
  %vm573 = vcmp.gt.f32.partialorder %v474, 0.0
  %vm574 = vcmp.gt.f32.partialorder %v476, 0.0
  %vm575 = vcmp.gt.f32.partialorder %v479, 0.0
  %vm576 = vcmp.gt.f32.partialorder %v481, 0.0
  %vm577 = vcmp.gt.f32.partialorder %v484, 0.0
  %vm578 = vcmp.gt.f32.partialorder %v486, 0.0
  %vm579 = vcmp.gt.f32.partialorder %v489, 0.0
  %vm580 = vcmp.gt.f32.partialorder %v491, 0.0
  %vm581 = vcmp.gt.f32.partialorder %v494, 0.0
  %vm582 = vcmp.gt.f32.partialorder %v496, 0.0
  %vm583 = vcmp.gt.f32.partialorder %v499, 0.0
  %vm584 = vcmp.gt.f32.partialorder %v501, 0.0
  %vm585 = vcmp.gt.f32.partialorder %v504, 0.0
  %vm586 = vcmp.gt.f32.partialorder %v506, 0.0
  %vm587 = vcmp.gt.f32.partialorder %v509, 0.0
  %vm588 = vcmp.gt.f32.partialorder %v511, 0.0
  %vm589 = vcmp.gt.f32.partialorder %v514, 0.0
  %vm590 = vcmp.gt.f32.partialorder %v516, 0.0
  %vm591 = vcmp.gt.f32.partialorder %v519, 0.0
  %vm592 = vcmp.gt.f32.partialorder %v521, 0.0
  %vm593 = vcmp.gt.f32.partialorder %v524, 0.0
  %vm594 = vcmp.gt.f32.partialorder %v526, 0.0
  %vm595 = vcmp.gt.f32.partialorder %v529, 0.0
  %vm596 = vcmp.gt.f32.partialorder %v531, 0.0
  %v597 = vmul.f32 %v374, 0.2
  %v598 = vmul.f32 %v376, 0.2
  %v599 = vmul.f32 %v379, 0.2
  %v600 = vmul.f32 %v381, 0.2
  %v601 = vmul.f32 %v384, 0.2
  %v602 = vmul.f32 %v386, 0.2
  %v603 = vmul.f32 %v389, 0.2
  %v604 = vmul.f32 %v391, 0.2
  %v605 = vmul.f32 %v394, 0.2
  %v606 = vmul.f32 %v396, 0.2
  %v607 = vmul.f32 %v399, 0.2
  %v608 = vmul.f32 %v401, 0.2
  %v609 = vmul.f32 %v404, 0.2
  %v610 = vmul.f32 %v406, 0.2
  %v611 = vmul.f32 %v409, 0.2
  %v612 = vmul.f32 %v411, 0.2
  %v613 = vmul.f32 %v414, 0.2
  %v614 = vmul.f32 %v416, 0.2
  %v615 = vmul.f32 %v419, 0.2
  %v616 = vmul.f32 %v421, 0.2
  %v617 = vmul.f32 %v424, 0.2
  %v618 = vmul.f32 %v426, 0.2
  %v619 = vmul.f32 %v429, 0.2
  %v620 = vmul.f32 %v431, 0.2
  %v621 = vmul.f32 %v434, 0.2
  %v622 = vmul.f32 %v436, 0.2
  %v623 = vmul.f32 %v439, 0.2
  %v624 = vmul.f32 %v441, 0.2
  %v625 = vmul.f32 %v444, 0.2
  %v626 = vmul.f32 %v446, 0.2
  %v627 = vmul.f32 %v449, 0.2
  %v628 = vmul.f32 %v451, 0.2
  %v629 = vmul.f32 %v454, 0.2
  %v630 = vmul.f32 %v456, 0.2
  %v631 = vmul.f32 %v459, 0.2
  %v632 = vmul.f32 %v461, 0.2
  %v633 = vmul.f32 %v464, 0.2
  %v634 = vmul.f32 %v466, 0.2
  %v635 = vmul.f32 %v469, 0.2
  %v636 = vmul.f32 %v471, 0.2
  %v637 = vmul.f32 %v474, 0.2
  %v638 = vmul.f32 %v476, 0.2
  %v639 = vmul.f32 %v479, 0.2
  %v640 = vmul.f32 %v481, 0.2
  %v641 = vmul.f32 %v484, 0.2
  %v642 = vmul.f32 %v486, 0.2
  %v643 = vmul.f32 %v489, 0.2
  %v644 = vmul.f32 %v491, 0.2
  %v645 = vmul.f32 %v494, 0.2
  %v646 = vmul.f32 %v496, 0.2
  %v647 = vmul.f32 %v499, 0.2
  %v648 = vmul.f32 %v501, 0.2
  %v649 = vmul.f32 %v504, 0.2
  %v650 = vmul.f32 %v506, 0.2
  %v651 = vmul.f32 %v509, 0.2
  %v652 = vmul.f32 %v511, 0.2
  %v653 = vmul.f32 %v514, 0.2
  %v654 = vmul.f32 %v516, 0.2
  %v655 = vmul.f32 %v519, 0.2
  %v656 = vmul.f32 %v521, 0.2
  %v657 = vmul.f32 %v524, 0.2
  %v658 = vmul.f32 %v526, 0.2
  %v659 = vmul.f32 %v529, 0.2
  %v660 = vmul.f32 %v531, 0.2
  %v661 = vsel %vm533, %v374, %v597
  %v662 = vsel %vm534, %v376, %v598
  %v663 = vsel %vm535, %v379, %v599
  %v664 = vsel %vm536, %v381, %v600
  %v665 = vsel %vm537, %v384, %v601
  %v666 = vsel %vm538, %v386, %v602
  %v667 = vsel %vm539, %v389, %v603
  %v668 = vsel %vm540, %v391, %v604
  %v669 = vsel %vm541, %v394, %v605
  %v670 = vsel %vm542, %v396, %v606
  %v671 = vsel %vm543, %v399, %v607
  %v672 = vsel %vm544, %v401, %v608
  %v673 = vsel %vm545, %v404, %v609
  %v674 = vsel %vm546, %v406, %v610
  %v675 = vsel %vm547, %v409, %v611
  %v676 = vsel %vm548, %v411, %v612
  %v677 = vsel %vm549, %v414, %v613
  %v678 = vsel %vm550, %v416, %v614
  %v679 = vsel %vm551, %v419, %v615
  %v680 = vsel %vm552, %v421, %v616
  %v681 = vsel %vm553, %v424, %v617
  %v682 = vsel %vm554, %v426, %v618
  %v683 = vsel %vm555, %v429, %v619
  %v684 = vsel %vm556, %v431, %v620
  %v685 = vsel %vm557, %v434, %v621
  %v686 = vsel %vm558, %v436, %v622
  %v687 = vsel %vm559, %v439, %v623
  %v688 = vsel %vm560, %v441, %v624
  %v689 = vsel %vm561, %v444, %v625
  %v690 = vsel %vm562, %v446, %v626
  %v691 = vsel %vm563, %v449, %v627
  %v692 = vsel %vm564, %v451, %v628
  %v693 = vsel %vm565, %v454, %v629
  %v694 = vsel %vm566, %v456, %v630
  %v695 = vsel %vm567, %v459, %v631
  %v696 = vsel %vm568, %v461, %v632
  %v697 = vsel %vm569, %v464, %v633
  %v698 = vsel %vm570, %v466, %v634
  %v699 = vsel %vm571, %v469, %v635
  %v700 = vsel %vm572, %v471, %v636
  %v701 = vsel %vm573, %v474, %v637
  %v702 = vsel %vm574, %v476, %v638
  %v703 = vsel %vm575, %v479, %v639
  %v704 = vsel %vm576, %v481, %v640
  %v705 = vsel %vm577, %v484, %v641
  %v706 = vsel %vm578, %v486, %v642
  %v707 = vsel %vm579, %v489, %v643
  %v708 = vsel %vm580, %v491, %v644
  %v709 = vsel %vm581, %v494, %v645
  %v710 = vsel %vm582, %v496, %v646
  %v711 = vsel %vm583, %v499, %v647
  %v712 = vsel %vm584, %v501, %v648
  %v713 = vsel %vm585, %v504, %v649
  %v714 = vsel %vm586, %v506, %v650
  %v715 = vsel %vm587, %v509, %v651
  %v716 = vsel %vm588, %v511, %v652
  %v717 = vsel %vm589, %v514, %v653
  %v718 = vsel %vm590, %v516, %v654
  %v719 = vsel %vm591, %v519, %v655
  %v720 = vsel %vm592, %v521, %v656
  %v721 = vsel %vm593, %v524, %v657
  %v722 = vsel %vm594, %v526, %v658
  %v723 = vsel %vm595, %v529, %v659
  %v724 = vsel %vm596, %v531, %v660
  %v725 = vpack.c.bf16 %v661, %v661
  %v726 = vpack.c.bf16 %v662, %v662
  %v727 = vpack.c.bf16 %v663, %v663
  %v728 = vpack.c.bf16 %v664, %v664
  %v729 = vpack.c.bf16 %v665, %v665
  %v730 = vpack.c.bf16 %v666, %v666
  %v731 = vpack.c.bf16 %v667, %v667
  %v732 = vpack.c.bf16 %v668, %v668
  %v733 = vpack.c.bf16 %v669, %v669
  %v734 = vpack.c.bf16 %v670, %v670
  %v735 = vpack.c.bf16 %v671, %v671
  %v736 = vpack.c.bf16 %v672, %v672
  %v737 = vpack.c.bf16 %v673, %v673
  %v738 = vpack.c.bf16 %v674, %v674
  %v739 = vpack.c.bf16 %v675, %v675
  %v740 = vpack.c.bf16 %v676, %v676
  %v741 = vpack.c.bf16 %v677, %v677
  %v742 = vpack.c.bf16 %v678, %v678
  %v743 = vpack.c.bf16 %v679, %v679
  %v744 = vpack.c.bf16 %v680, %v680
  %v745 = vpack.c.bf16 %v681, %v681
  %v746 = vpack.c.bf16 %v682, %v682
  %v747 = vpack.c.bf16 %v683, %v683
  %v748 = vpack.c.bf16 %v684, %v684
  %v749 = vpack.c.bf16 %v685, %v685
  %v750 = vpack.c.bf16 %v686, %v686
  %v751 = vpack.c.bf16 %v687, %v687
  %v752 = vpack.c.bf16 %v688, %v688
  %v753 = vpack.c.bf16 %v689, %v689
  %v754 = vpack.c.bf16 %v690, %v690
  %v755 = vpack.c.bf16 %v691, %v691
  %v756 = vpack.c.bf16 %v692, %v692
  %v757 = vpack.c.bf16 %v693, %v693
  %v758 = vpack.c.bf16 %v694, %v694
  %v759 = vpack.c.bf16 %v695, %v695
  %v760 = vpack.c.bf16 %v696, %v696
  %v761 = vpack.c.bf16 %v697, %v697
  %v762 = vpack.c.bf16 %v698, %v698
  %v763 = vpack.c.bf16 %v699, %v699
  %v764 = vpack.c.bf16 %v700, %v700
  %v765 = vpack.c.bf16 %v701, %v701
  %v766 = vpack.c.bf16 %v702, %v702
  %v767 = vpack.c.bf16 %v703, %v703
  %v768 = vpack.c.bf16 %v704, %v704
  %v769 = vpack.c.bf16 %v705, %v705
  %v770 = vpack.c.bf16 %v706, %v706
  %v771 = vpack.c.bf16 %v707, %v707
  %v772 = vpack.c.bf16 %v708, %v708
  %v773 = vpack.c.bf16 %v709, %v709
  %v774 = vpack.c.bf16 %v710, %v710
  %v775 = vpack.c.bf16 %v711, %v711
  %v776 = vpack.c.bf16 %v712, %v712
  %v777 = vpack.c.bf16 %v713, %v713
  %v778 = vpack.c.bf16 %v714, %v714
  %v779 = vpack.c.bf16 %v715, %v715
  %v780 = vpack.c.bf16 %v716, %v716
  %v781 = vpack.c.bf16 %v717, %v717
  %v782 = vpack.c.bf16 %v718, %v718
  %v783 = vpack.c.bf16 %v719, %v719
  %v784 = vpack.c.bf16 %v720, %v720
  %v785 = vpack.c.bf16 %v721, %v721
  %v786 = vpack.c.bf16 %v722, %v722
  %v787 = vpack.c.bf16 %v723, %v723
  %v788 = vpack.c.bf16 %v724, %v724
  %789 = vst [vmem:[%s3] sm:$0xf] %v725
  %790 = vst [vmem:[%s3 + $0x4] sm:$0xf] %v726
  %791 = vst [vmem:[%s3 + $0x8] sm:$0xf] %v727
  %792 = vst [vmem:[%s3 + $0xc] sm:$0xf] %v728
  %793 = vst [vmem:[%s3 + $0x10] sm:$0xf] %v729
  %794 = vst [vmem:[%s3 + $0x14] sm:$0xf] %v730
  %795 = vst [vmem:[%s3 + $0x18] sm:$0xf] %v731
  %796 = vst [vmem:[%s3 + $0x1c] sm:$0xf] %v732
  %797 = vst [vmem:[%s3 + $0x20] sm:$0xf] %v733
  %798 = vst [vmem:[%s3 + $0x24] sm:$0xf] %v734
  %799 = vst [vmem:[%s3 + $0x28] sm:$0xf] %v735
  %800 = vst [vmem:[%s3 + $0x2c] sm:$0xf] %v736
  %801 = vst [vmem:[%s3 + $0x30] sm:$0xf] %v737
  %802 = vst [vmem:[%s3 + $0x34] sm:$0xf] %v738
  %803 = vst [vmem:[%s3 + $0x38] sm:$0xf] %v739
  %804 = vst [vmem:[%s3 + $0x3c] sm:$0xf] %v740
  %805 = vst [vmem:[%s3 + $0x40] sm:$0xf] %v741
  %806 = vst [vmem:[%s3 + $0x44] sm:$0xf] %v742
  %807 = vst [vmem:[%s3 + $0x48] sm:$0xf] %v743
  %808 = vst [vmem:[%s3 + $0x4c] sm:$0xf] %v744
  %809 = vst [vmem:[%s3 + $0x50] sm:$0xf] %v745
  %810 = vst [vmem:[%s3 + $0x54] sm:$0xf] %v746
  %811 = vst [vmem:[%s3 + $0x58] sm:$0xf] %v747
  %812 = vst [vmem:[%s3 + $0x5c] sm:$0xf] %v748
  %813 = vst [vmem:[%s3 + $0x60] sm:$0xf] %v749
  %814 = vst [vmem:[%s3 + $0x64] sm:$0xf] %v750
  %815 = vst [vmem:[%s3 + $0x68] sm:$0xf] %v751
  %816 = vst [vmem:[%s3 + $0x6c] sm:$0xf] %v752
  %817 = vst [vmem:[%s3 + $0x70] sm:$0xf] %v753
  %818 = vst [vmem:[%s3 + $0x74] sm:$0xf] %v754
  %819 = vst [vmem:[%s3 + $0x78] sm:$0xf] %v755
  %820 = vst [vmem:[%s3 + $0x7c] sm:$0xf] %v756
  %821 = vst [vmem:[%s3 + $0x80] sm:$0xf] %v757
  %822 = vst [vmem:[%s3 + $0x84] sm:$0xf] %v758
  %823 = vst [vmem:[%s3 + $0x88] sm:$0xf] %v759
  %824 = vst [vmem:[%s3 + $0x8c] sm:$0xf] %v760
  %825 = vst [vmem:[%s3 + $0x90] sm:$0xf] %v761
  %826 = vst [vmem:[%s3 + $0x94] sm:$0xf] %v762
  %827 = vst [vmem:[%s3 + $0x98] sm:$0xf] %v763
  %828 = vst [vmem:[%s3 + $0x9c] sm:$0xf] %v764
  %829 = vst [vmem:[%s3 + $0xa0] sm:$0xf] %v765
  %830 = vst [vmem:[%s3 + $0xa4] sm:$0xf] %v766
  %831 = vst [vmem:[%s3 + $0xa8] sm:$0xf] %v767
  %832 = vst [vmem:[%s3 + $0xac] sm:$0xf] %v768
  %833 = vst [vmem:[%s3 + $0xb0] sm:$0xf] %v769
  %834 = vst [vmem:[%s3 + $0xb4] sm:$0xf] %v770
  %835 = vst [vmem:[%s3 + $0xb8] sm:$0xf] %v771
  %836 = vst [vmem:[%s3 + $0xbc] sm:$0xf] %v772
  %837 = vst [vmem:[%s3 + $0xc0] sm:$0xf] %v773
  %838 = vst [vmem:[%s3 + $0xc4] sm:$0xf] %v774
  %839 = vst [vmem:[%s3 + $0xc8] sm:$0xf] %v775
  %840 = vst [vmem:[%s3 + $0xcc] sm:$0xf] %v776
  %841 = vst [vmem:[%s3 + $0xd0] sm:$0xf] %v777
  %842 = vst [vmem:[%s3 + $0xd4] sm:$0xf] %v778
  %843 = vst [vmem:[%s3 + $0xd8] sm:$0xf] %v779
  %844 = vst [vmem:[%s3 + $0xdc] sm:$0xf] %v780
  %845 = vst [vmem:[%s3 + $0xe0] sm:$0xf] %v781
  %846 = vst [vmem:[%s3 + $0xe4] sm:$0xf] %v782
  %847 = vst [vmem:[%s3 + $0xe8] sm:$0xf] %v783
  %848 = vst [vmem:[%s3 + $0xec] sm:$0xf] %v784
  %849 = vst [vmem:[%s3 + $0xf0] sm:$0xf] %v785
  %850 = vst [vmem:[%s3 + $0xf4] sm:$0xf] %v786
  %851 = vst [vmem:[%s3 + $0xf8] sm:$0xf] %v787
  %852 = vst [vmem:[%s3 + $0xfc] sm:$0xf] %v788
  // Predicated region
  $region14: #{_lambda_.8} parent=0 // pred_check
    _
  $region15: #{_lambda_.8} parent=0 // pred_check_branch
    %854 = sbr.rel (0) target = $region17
  $region16: #{_lambda_.8} parent=0 // pred_region
    _
  $region17: #{_lambda_.8} parent=0 // pred_fallthru
    _
  // Predicated region
  $region18: #{_lambda_.8} parent=0 // pred_check
    _
  $region19: #{_lambda_.8} parent=0 // pred_check_branch
    %856 = sbr.rel (0) target = $region21
  $region20: #{_lambda_.8} parent=0 // pred_region
    _
  $region21: #{_lambda_.8} parent=0 // pred_fallthru
    _

// kernel: _lambda_.9
$region0: #{_lambda_.9}
  #allocation0 [shape = 'u32[]', space=smem, size = 0x4, offset = 0x4, fixed_abs, tag = 'smem constant byte address 0x4 - core index']
  #allocation1 [shape = 'u32[72,128]{1,0:T(1,128)}', space=vmem, size = 0x9000, scoped, tag = 'internal scratch']
  %s0 = inlined_call_operand.vmem [shape: bf16[128,128], index: 0, kind: input, shape index: {}]
  %s1 = inlined_call_operand.vmem [shape: bf16[128,128], index: 1, kind: input, shape index: {}]
  %s2 = inlined_call_operand.vmem [shape: bf16[128,128], index: 2, kind: output, shape index: {0}]
  %s3 = inlined_call_operand.vmem [shape: f32[1,2,128], index: 3, kind: output, shape index: {1}]
  %4 = xla_tuple %s2, %s3
  %s5 = sld [smem:[#allocation0]]
  $region26: #{_lambda_.9} parent=0
    _
  %s7 = ssub.s32 1, %s5
  %s8 = scalar_select 0, %s7, %s5
  // Predicated region
  $region2: #{_lambda_.9} parent=0 // pred_check
    _
  $region3: #{_lambda_.9} parent=0 // pred_check_branch
    %10 = sbr.rel (0) target = $region5
  $region4: #{_lambda_.9} parent=0 // pred_region
    _
  $region5: #{_lambda_.9} parent=0 // pred_fallthru
    _
  // Predicated region
  $region6: #{_lambda_.9} parent=0 // pred_check
    _
  $region7: #{_lambda_.9} parent=0 // pred_check_branch
    %12 = sbr.rel (0) target = $region9
  $region8: #{_lambda_.9} parent=0 // pred_region
    _
  $region9: #{_lambda_.9} parent=0 // pred_fallthru
    _
  %v13 = vld [vmem:[%s0] sm:$0xf]
  %v14 = vld [vmem:[%s0 + $0x4] sm:$0xf]
  %v15 = vld [vmem:[%s0 + $0x8] sm:$0xf]
  %v16 = vld [vmem:[%s0 + $0xc] sm:$0xf]
  %v17 = vld [vmem:[%s0 + $0x10] sm:$0xf]
  %v18 = vld [vmem:[%s0 + $0x14] sm:$0xf]
  %v19 = vld [vmem:[%s0 + $0x18] sm:$0xf]
  %v20 = vld [vmem:[%s0 + $0x1c] sm:$0xf]
  %v21 = vld [vmem:[%s0 + $0x20] sm:$0xf]
  %v22 = vld [vmem:[%s0 + $0x24] sm:$0xf]
  %v23 = vld [vmem:[%s0 + $0x28] sm:$0xf]
  %v24 = vld [vmem:[%s0 + $0x2c] sm:$0xf]
  %v25 = vld [vmem:[%s0 + $0x30] sm:$0xf]
  %v26 = vld [vmem:[%s0 + $0x34] sm:$0xf]
  %v27 = vld [vmem:[%s0 + $0x38] sm:$0xf]
  %v28 = vld [vmem:[%s0 + $0x3c] sm:$0xf]
  %v29 = vld [vmem:[%s1] sm:$0xf]
  %v30 = vld [vmem:[%s1 + $0x4] sm:$0xf]
  %v31 = vld [vmem:[%s1 + $0x8] sm:$0xf]
  %v32 = vld [vmem:[%s1 + $0xc] sm:$0xf]
  %v33 = vld [vmem:[%s1 + $0x10] sm:$0xf]
  %v34 = vld [vmem:[%s1 + $0x14] sm:$0xf]
  %v35 = vld [vmem:[%s1 + $0x18] sm:$0xf]
  %v36 = vld [vmem:[%s1 + $0x1c] sm:$0xf]
  %v37 = vld [vmem:[%s1 + $0x20] sm:$0xf]
  %v38 = vld [vmem:[%s1 + $0x24] sm:$0xf]
  %v39 = vld [vmem:[%s1 + $0x28] sm:$0xf]
  %v40 = vld [vmem:[%s1 + $0x2c] sm:$0xf]
  %v41 = vld [vmem:[%s1 + $0x30] sm:$0xf]
  %v42 = vld [vmem:[%s1 + $0x34] sm:$0xf]
  %v43 = vld [vmem:[%s1 + $0x38] sm:$0xf]
  %v44 = vld [vmem:[%s1 + $0x3c] sm:$0xf]
  %v61 = vunpack.c.l.b16 %v13
  %v62 = vunpack.c.l.b16 %v14
  %v63 = vunpack.c.l.b16 %v15
  %v64 = vunpack.c.l.b16 %v16
  %v65 = vunpack.c.l.b16 %v17
  %v66 = vunpack.c.l.b16 %v18
  %v67 = vunpack.c.l.b16 %v19
  %v68 = vunpack.c.l.b16 %v20
  %v69 = vunpack.c.l.b16 %v21
  %v70 = vunpack.c.l.b16 %v22
  %v71 = vunpack.c.l.b16 %v23
  %v72 = vunpack.c.l.b16 %v24
  %v73 = vunpack.c.l.b16 %v25
  %v74 = vunpack.c.l.b16 %v26
  %v75 = vunpack.c.l.b16 %v27
  %v76 = vunpack.c.l.b16 %v28
  %v77 = vpack.c.b16 %v62, %v61
  %v78 = vpack.c.b16 %v64, %v63
  %v79 = vpack.c.b16 %v66, %v65
  %v80 = vpack.c.b16 %v68, %v67
  %v81 = vpack.c.b16 %v70, %v69
  %v82 = vpack.c.b16 %v72, %v71
  %v83 = vpack.c.b16 %v74, %v73
  %v84 = vpack.c.b16 %v76, %v75
  %v109 = vunpack.c.l.b16 %v29
  %v110 = vunpack.c.l.b16 %v30
  %v111 = vunpack.c.l.b16 %v31
  %v112 = vunpack.c.l.b16 %v32
  %v113 = vunpack.c.l.b16 %v33
  %v114 = vunpack.c.l.b16 %v34
  %v115 = vunpack.c.l.b16 %v35
  %v116 = vunpack.c.l.b16 %v36
  %v117 = vunpack.c.l.b16 %v37
  %v118 = vunpack.c.l.b16 %v38
  %v119 = vunpack.c.l.b16 %v39
  %v120 = vunpack.c.l.b16 %v40
  %v121 = vunpack.c.l.b16 %v41
  %v122 = vunpack.c.l.b16 %v42
  %v123 = vunpack.c.l.b16 %v43
  %v124 = vunpack.c.l.b16 %v44
  %v125 = vpack.c.b16 %v110, %v109
  %v126 = vpack.c.b16 %v112, %v111
  %v127 = vpack.c.b16 %v114, %v113
  %v128 = vpack.c.b16 %v116, %v115
  %v129 = vpack.c.b16 %v118, %v117
  %v130 = vpack.c.b16 %v120, %v119
  %v131 = vpack.c.b16 %v122, %v121
  %v132 = vpack.c.b16 %v124, %v123
  %141 = vmatpush.bf16.msra.mxu0 %v132
  %142 = vmatpush.bf16.msra.mxu0 %v131
  %143 = vmatpush.bf16.msra.mxu0 %v130
  %144 = vmatpush.bf16.msra.mxu0 %v129
  %145 = vmatpush.bf16.msra.mxu0 %v128
  %146 = vmatpush.bf16.msra.mxu0 %v127
  %147 = vmatpush.bf16.msra.mxu0 %v126
  %148 = vmatpush.bf16.msra.mxu0 %v125
  %149 = vmatmul.bf16.gmra.mxu0 %v77
  %v150 = vpop.f32.mrf.mxu0
  %v151 = vadd.f32 0.0, %v150
  %v152 = vpop.f32.mrf.mxu0
  %v153 = vadd.f32 0.0, %v152
  %154 = vmatmul.bf16.gmra.mxu0 %v78
  %v155 = vpop.f32.mrf.mxu0
  %v156 = vadd.f32 0.0, %v155
  %v157 = vpop.f32.mrf.mxu0
  %v158 = vadd.f32 0.0, %v157
  %159 = vmatmul.bf16.gmra.mxu0 %v79
  %v160 = vpop.f32.mrf.mxu0
  %v161 = vadd.f32 0.0, %v160
  %v162 = vpop.f32.mrf.mxu0
  %v163 = vadd.f32 0.0, %v162
  %164 = vmatmul.bf16.gmra.mxu0 %v80
  %v165 = vpop.f32.mrf.mxu0
  %v166 = vadd.f32 0.0, %v165
  %v167 = vpop.f32.mrf.mxu0
  %v168 = vadd.f32 0.0, %v167
  %169 = vmatmul.bf16.gmra.mxu0 %v81
  %v170 = vpop.f32.mrf.mxu0
  %v171 = vadd.f32 0.0, %v170
  %v172 = vpop.f32.mrf.mxu0
  %v173 = vadd.f32 0.0, %v172
  %174 = vmatmul.bf16.gmra.mxu0 %v82
  %v175 = vpop.f32.mrf.mxu0
  %v176 = vadd.f32 0.0, %v175
  %v177 = vpop.f32.mrf.mxu0
  %v178 = vadd.f32 0.0, %v177
  %179 = vmatmul.bf16.gmra.mxu0 %v83
  %v180 = vpop.f32.mrf.mxu0
  %v181 = vadd.f32 0.0, %v180
  %v182 = vpop.f32.mrf.mxu0
  %v183 = vadd.f32 0.0, %v182
  %184 = vmatmul.bf16.gmra.mxu0 %v84
  %v185 = vpop.f32.mrf.mxu0
  %v186 = vadd.f32 0.0, %v185
  %v187 = vpop.f32.mrf.mxu0
  %v188 = vadd.f32 0.0, %v187
  %189 = vdwg.mxu0
  %v190 = vpack.c.bf16 %v151, %v151
  %v191 = vpack.c.bf16 %v153, %v153
  %v192 = vpack.c.bf16 %v156, %v156
  %v193 = vpack.c.bf16 %v158, %v158
  %v194 = vpack.c.bf16 %v161, %v161
  %v195 = vpack.c.bf16 %v163, %v163
  %v196 = vpack.c.bf16 %v166, %v166
  %v197 = vpack.c.bf16 %v168, %v168
  %v198 = vpack.c.bf16 %v171, %v171
  %v199 = vpack.c.bf16 %v173, %v173
  %v200 = vpack.c.bf16 %v176, %v176
  %v201 = vpack.c.bf16 %v178, %v178
  %v202 = vpack.c.bf16 %v181, %v181
  %v203 = vpack.c.bf16 %v183, %v183
  %v204 = vpack.c.bf16 %v186, %v186
  %v205 = vpack.c.bf16 %v188, %v188
  %206 = vst [vmem:[%s2] sm:$0xf] %v190
  %207 = vst [vmem:[%s2 + $0x4] sm:$0xf] %v191
  %208 = vst [vmem:[%s2 + $0x8] sm:$0xf] %v192
  %209 = vst [vmem:[%s2 + $0xc] sm:$0xf] %v193
  %210 = vst [vmem:[%s2 + $0x10] sm:$0xf] %v194
  %211 = vst [vmem:[%s2 + $0x14] sm:$0xf] %v195
  %212 = vst [vmem:[%s2 + $0x18] sm:$0xf] %v196
  %213 = vst [vmem:[%s2 + $0x1c] sm:$0xf] %v197
  %214 = vst [vmem:[%s2 + $0x20] sm:$0xf] %v198
  %215 = vst [vmem:[%s2 + $0x24] sm:$0xf] %v199
  %216 = vst [vmem:[%s2 + $0x28] sm:$0xf] %v200
  %217 = vst [vmem:[%s2 + $0x2c] sm:$0xf] %v201
  %218 = vst [vmem:[%s2 + $0x30] sm:$0xf] %v202
  %219 = vst [vmem:[%s2 + $0x34] sm:$0xf] %v203
  %220 = vst [vmem:[%s2 + $0x38] sm:$0xf] %v204
  %221 = vst [vmem:[%s2 + $0x3c] sm:$0xf] %v205
  %v222 = vadd.f32 %v151, %v153
  %v223 = vadd.f32 %v222, %v156
  %v224 = vadd.f32 %v223, %v158
  %v225 = vadd.f32 %v224, %v161
  %v226 = vadd.f32 %v225, %v163
  %v227 = vadd.f32 %v226, %v166
  %v228 = vadd.f32 %v227, %v168
  %v229 = vadd.f32 %v228, %v171
  %v230 = vadd.f32 %v229, %v173
  %v231 = vadd.f32 %v230, %v176
  %v232 = vadd.f32 %v231, %v178
  %v233 = vadd.f32 %v232, %v181
  %v234 = vadd.f32 %v233, %v183
  %v235 = vadd.f32 %v234, %v186
  %v236 = vadd.f32 %v235, %v188
  %v237 = vrot.slane %v236, 4
  %v238 = vadd.f32 %v236, %v237
  %v239 = vrot.slane %v238, 2
  %v240 = vadd.f32 %v238, %v239
  %v241 = vrot.slane %v240, 1
  %v242 = vadd.f32 %v240, %v241
  %243 = vst [vmem:[%s3] sm:$0x1] %v242
  %v244 = vmul.f32 %v151, %v151
  %v245 = vmul.f32 %v153, %v153
  %v246 = vmul.f32 %v156, %v156
  %v247 = vmul.f32 %v158, %v158
  %v248 = vmul.f32 %v161, %v161
  %v249 = vmul.f32 %v163, %v163
  %v250 = vmul.f32 %v166, %v166
  %v251 = vmul.f32 %v168, %v168
  %v252 = vmul.f32 %v171, %v171
  %v253 = vmul.f32 %v173, %v173
  %v254 = vmul.f32 %v176, %v176
  %v255 = vmul.f32 %v178, %v178
  %v256 = vmul.f32 %v181, %v181
  %v257 = vmul.f32 %v183, %v183
  %v258 = vmul.f32 %v186, %v186
  %v259 = vmul.f32 %v188, %v188
  %v260 = vadd.f32 %v244, %v245
  %v261 = vadd.f32 %v260, %v246
  %v262 = vadd.f32 %v261, %v247
  %v263 = vadd.f32 %v262, %v248
  %v264 = vadd.f32 %v263, %v249
  %v265 = vadd.f32 %v264, %v250
  %v266 = vadd.f32 %v265, %v251
  %v267 = vadd.f32 %v266, %v252
  %v268 = vadd.f32 %v267, %v253
  %v269 = vadd.f32 %v268, %v254
  %v270 = vadd.f32 %v269, %v255
  %v271 = vadd.f32 %v270, %v256
  %v272 = vadd.f32 %v271, %v257
  %v273 = vadd.f32 %v272, %v258
  %v274 = vadd.f32 %v273, %v259
  %v275 = vrot.slane %v274, 4
  %v276 = vadd.f32 %v274, %v275
  %v277 = vrot.slane %v276, 2
  %v278 = vadd.f32 %v276, %v277
  %v279 = vrot.slane %v278, 1
  %v280 = vadd.f32 %v278, %v279
  %281 = vst [vmem:[%s3 + $0x1] sm:$0x1] %v280
  // Predicated region
  $region10: #{_lambda_.9} parent=0 // pred_check
    _
  $region11: #{_lambda_.9} parent=0 // pred_check_branch
    %283 = sbr.rel (0) target = $region13
  $region12: #{_lambda_.9} parent=0 // pred_region
    _
  $region13: #{_lambda_.9} parent=0 // pred_fallthru
    _
  // Predicated region
  $region14: #{_lambda_.9} parent=0 // pred_check
    _
  $region15: #{_lambda_.9} parent=0 // pred_check_branch
    %285 = sbr.rel (0) target = $region17
  $region16: #{_lambda_.9} parent=0 // pred_region
    _
  $region17: #{_lambda_.9} parent=0 // pred_fallthru
    _
  // Predicated region
  $region18: #{_lambda_.9} parent=0 // pred_check
    _
  $region19: #{_lambda_.9} parent=0 // pred_check_branch
    %287 = sbr.rel (0) target = $region21
  $region20: #{_lambda_.9} parent=0 // pred_region
    _
  $region21: #{_lambda_.9} parent=0 // pred_fallthru
    _
  // Predicated region
  $region22: #{_lambda_.9} parent=0 // pred_check
    _
  $region23: #{_lambda_.9} parent=0 // pred_check_branch
    %289 = sbr.rel (0) target = $region25
  $region24: #{_lambda_.9} parent=0 // pred_region
    _
  $region25: #{_lambda_.9} parent=0 // pred_fallthru
    _

// kernel: _lambda_.10
$region0: #{_lambda_.10}
  #allocation0 [shape = 'u32[]', space=smem, size = 0x4, offset = 0x4, fixed_abs, tag = 'smem constant byte address 0x4 - core index']
  #allocation1 [shape = 'u32[72,128]{1,0:T(1,128)}', space=vmem, size = 0x9000, scoped, tag = 'internal scratch']
  %s0 = inlined_call_operand.vmem [shape: bf16[128,128], index: 0, kind: input, shape index: {}]
  %s1 = inlined_call_operand.vmem [shape: f32[1,128], index: 1, kind: input, shape index: {}]
  %s2 = inlined_call_operand.vmem [shape: f32[1,128], index: 2, kind: input, shape index: {}]
  %s3 = inlined_call_operand.vmem [shape: bf16[128,128], index: 3, kind: output, shape index: {}]
  %s4 = sld [smem:[#allocation0]]
  $region22: #{_lambda_.10} parent=0
    _
  %s6 = ssub.s32 1, %s4
  %s7 = scalar_select 0, %s6, %s4
  // Predicated region
  $region2: #{_lambda_.10} parent=0 // pred_check
    _
  $region3: #{_lambda_.10} parent=0 // pred_check_branch
    %9 = sbr.rel (0) target = $region5
  $region4: #{_lambda_.10} parent=0 // pred_region
    _
  $region5: #{_lambda_.10} parent=0 // pred_fallthru
    _
  // Predicated region
  $region6: #{_lambda_.10} parent=0 // pred_check
    _
  $region7: #{_lambda_.10} parent=0 // pred_check_branch
    %11 = sbr.rel (0) target = $region9
  $region8: #{_lambda_.10} parent=0 // pred_region
    _
  $region9: #{_lambda_.10} parent=0 // pred_fallthru
    _
  // Predicated region
  $region10: #{_lambda_.10} parent=0 // pred_check
    _
  $region11: #{_lambda_.10} parent=0 // pred_check_branch
    %13 = sbr.rel (0) target = $region13
  $region12: #{_lambda_.10} parent=0 // pred_region
    _
  $region13: #{_lambda_.10} parent=0 // pred_fallthru
    _
  %v14 = vld [vmem:[%s0] sm:$0xf]
  %v15 = vld [vmem:[%s0 + $0x4] sm:$0xf]
  %v16 = vld [vmem:[%s0 + $0x8] sm:$0xf]
  %v17 = vld [vmem:[%s0 + $0xc] sm:$0xf]
  %v18 = vld [vmem:[%s0 + $0x10] sm:$0xf]
  %v19 = vld [vmem:[%s0 + $0x14] sm:$0xf]
  %v20 = vld [vmem:[%s0 + $0x18] sm:$0xf]
  %v21 = vld [vmem:[%s0 + $0x1c] sm:$0xf]
  %v22 = vld [vmem:[%s0 + $0x20] sm:$0xf]
  %v23 = vld [vmem:[%s0 + $0x24] sm:$0xf]
  %v24 = vld [vmem:[%s0 + $0x28] sm:$0xf]
  %v25 = vld [vmem:[%s0 + $0x2c] sm:$0xf]
  %v26 = vld [vmem:[%s0 + $0x30] sm:$0xf]
  %v27 = vld [vmem:[%s0 + $0x34] sm:$0xf]
  %v28 = vld [vmem:[%s0 + $0x38] sm:$0xf]
  %v29 = vld [vmem:[%s0 + $0x3c] sm:$0xf]
  %v30 = vunpack.c.l.bf16 %v14
  %v31 = vunpack.c.l.bf16 %v15
  %v32 = vunpack.c.l.bf16 %v16
  %v33 = vunpack.c.l.bf16 %v17
  %v34 = vunpack.c.l.bf16 %v18
  %v35 = vunpack.c.l.bf16 %v19
  %v36 = vunpack.c.l.bf16 %v20
  %v37 = vunpack.c.l.bf16 %v21
  %v38 = vunpack.c.l.bf16 %v22
  %v39 = vunpack.c.l.bf16 %v23
  %v40 = vunpack.c.l.bf16 %v24
  %v41 = vunpack.c.l.bf16 %v25
  %v42 = vunpack.c.l.bf16 %v26
  %v43 = vunpack.c.l.bf16 %v27
  %v44 = vunpack.c.l.bf16 %v28
  %v45 = vunpack.c.l.bf16 %v29
  %v46 = vld [vmem:[%s1] sm:$0x1]
  %v48 = vperm.slane %v46, 0
  %v50 = vmul.f32 %v30, %v48
  %v51 = vmul.f32 %v31, %v48
  %v52 = vmul.f32 %v32, %v48
  %v53 = vmul.f32 %v33, %v48
  %v54 = vmul.f32 %v34, %v48
  %v55 = vmul.f32 %v35, %v48
  %v56 = vmul.f32 %v36, %v48
  %v57 = vmul.f32 %v37, %v48
  %v58 = vmul.f32 %v38, %v48
  %v59 = vmul.f32 %v39, %v48
  %v60 = vmul.f32 %v40, %v48
  %v61 = vmul.f32 %v41, %v48
  %v62 = vmul.f32 %v42, %v48
  %v63 = vmul.f32 %v43, %v48
  %v64 = vmul.f32 %v44, %v48
  %v65 = vmul.f32 %v45, %v48
  %v66 = vld [vmem:[%s2] sm:$0x1]
  %v68 = vperm.slane %v66, 0
  %v70 = vadd.f32 %v50, %v68
  %v71 = vadd.f32 %v51, %v68
  %v72 = vadd.f32 %v52, %v68
  %v73 = vadd.f32 %v53, %v68
  %v74 = vadd.f32 %v54, %v68
  %v75 = vadd.f32 %v55, %v68
  %v76 = vadd.f32 %v56, %v68
  %v77 = vadd.f32 %v57, %v68
  %v78 = vadd.f32 %v58, %v68
  %v79 = vadd.f32 %v59, %v68
  %v80 = vadd.f32 %v60, %v68
  %v81 = vadd.f32 %v61, %v68
  %v82 = vadd.f32 %v62, %v68
  %v83 = vadd.f32 %v63, %v68
  %v84 = vadd.f32 %v64, %v68
  %v85 = vadd.f32 %v65, %v68
  %vm86 = vcmp.gt.f32.partialorder %v70, 0.0
  %vm87 = vcmp.gt.f32.partialorder %v71, 0.0
  %vm88 = vcmp.gt.f32.partialorder %v72, 0.0
  %vm89 = vcmp.gt.f32.partialorder %v73, 0.0
  %vm90 = vcmp.gt.f32.partialorder %v74, 0.0
  %vm91 = vcmp.gt.f32.partialorder %v75, 0.0
  %vm92 = vcmp.gt.f32.partialorder %v76, 0.0
  %vm93 = vcmp.gt.f32.partialorder %v77, 0.0
  %vm94 = vcmp.gt.f32.partialorder %v78, 0.0
  %vm95 = vcmp.gt.f32.partialorder %v79, 0.0
  %vm96 = vcmp.gt.f32.partialorder %v80, 0.0
  %vm97 = vcmp.gt.f32.partialorder %v81, 0.0
  %vm98 = vcmp.gt.f32.partialorder %v82, 0.0
  %vm99 = vcmp.gt.f32.partialorder %v83, 0.0
  %vm100 = vcmp.gt.f32.partialorder %v84, 0.0
  %vm101 = vcmp.gt.f32.partialorder %v85, 0.0
  %v102 = vmul.f32 %v70, 0.2
  %v103 = vmul.f32 %v71, 0.2
  %v104 = vmul.f32 %v72, 0.2
  %v105 = vmul.f32 %v73, 0.2
  %v106 = vmul.f32 %v74, 0.2
  %v107 = vmul.f32 %v75, 0.2
  %v108 = vmul.f32 %v76, 0.2
  %v109 = vmul.f32 %v77, 0.2
  %v110 = vmul.f32 %v78, 0.2
  %v111 = vmul.f32 %v79, 0.2
  %v112 = vmul.f32 %v80, 0.2
  %v113 = vmul.f32 %v81, 0.2
  %v114 = vmul.f32 %v82, 0.2
  %v115 = vmul.f32 %v83, 0.2
  %v116 = vmul.f32 %v84, 0.2
  %v117 = vmul.f32 %v85, 0.2
  %v118 = vsel %vm86, %v70, %v102
  %v119 = vsel %vm87, %v71, %v103
  %v120 = vsel %vm88, %v72, %v104
  %v121 = vsel %vm89, %v73, %v105
  %v122 = vsel %vm90, %v74, %v106
  %v123 = vsel %vm91, %v75, %v107
  %v124 = vsel %vm92, %v76, %v108
  %v125 = vsel %vm93, %v77, %v109
  %v126 = vsel %vm94, %v78, %v110
  %v127 = vsel %vm95, %v79, %v111
  %v128 = vsel %vm96, %v80, %v112
  %v129 = vsel %vm97, %v81, %v113
  %v130 = vsel %vm98, %v82, %v114
  %v131 = vsel %vm99, %v83, %v115
  %v132 = vsel %vm100, %v84, %v116
  %v133 = vsel %vm101, %v85, %v117
  %v134 = vpack.c.bf16 %v118, %v118
  %v135 = vpack.c.bf16 %v119, %v119
  %v136 = vpack.c.bf16 %v120, %v120
  %v137 = vpack.c.bf16 %v121, %v121
  %v138 = vpack.c.bf16 %v122, %v122
  %v139 = vpack.c.bf16 %v123, %v123
  %v140 = vpack.c.bf16 %v124, %v124
  %v141 = vpack.c.bf16 %v125, %v125
  %v142 = vpack.c.bf16 %v126, %v126
  %v143 = vpack.c.bf16 %v127, %v127
  %v144 = vpack.c.bf16 %v128, %v128
  %v145 = vpack.c.bf16 %v129, %v129
  %v146 = vpack.c.bf16 %v130, %v130
  %v147 = vpack.c.bf16 %v131, %v131
  %v148 = vpack.c.bf16 %v132, %v132
  %v149 = vpack.c.bf16 %v133, %v133
  %150 = vst [vmem:[%s3] sm:$0xf] %v134
  %151 = vst [vmem:[%s3 + $0x4] sm:$0xf] %v135
  %152 = vst [vmem:[%s3 + $0x8] sm:$0xf] %v136
  %153 = vst [vmem:[%s3 + $0xc] sm:$0xf] %v137
  %154 = vst [vmem:[%s3 + $0x10] sm:$0xf] %v138
  %155 = vst [vmem:[%s3 + $0x14] sm:$0xf] %v139
  %156 = vst [vmem:[%s3 + $0x18] sm:$0xf] %v140
  %157 = vst [vmem:[%s3 + $0x1c] sm:$0xf] %v141
  %158 = vst [vmem:[%s3 + $0x20] sm:$0xf] %v142
  %159 = vst [vmem:[%s3 + $0x24] sm:$0xf] %v143
  %160 = vst [vmem:[%s3 + $0x28] sm:$0xf] %v144
  %161 = vst [vmem:[%s3 + $0x2c] sm:$0xf] %v145
  %162 = vst [vmem:[%s3 + $0x30] sm:$0xf] %v146
  %163 = vst [vmem:[%s3 + $0x34] sm:$0xf] %v147
  %164 = vst [vmem:[%s3 + $0x38] sm:$0xf] %v148
  %165 = vst [vmem:[%s3 + $0x3c] sm:$0xf] %v149
  // Predicated region
  $region14: #{_lambda_.10} parent=0 // pred_check
    _
  $region15: #{_lambda_.10} parent=0 // pred_check_branch
    %167 = sbr.rel (0) target = $region17
  $region16: #{_lambda_.10} parent=0 // pred_region
    _
  $region17: #{_lambda_.10} parent=0 // pred_fallthru
    _
  // Predicated region
  $region18: #{_lambda_.10} parent=0 // pred_check
    _
  $region19: #{_lambda_.10} parent=0 // pred_check_branch
    %169 = sbr.rel (0) target = $region21
  $region20: #{_lambda_.10} parent=0 // pred_region
    _
  $region21: #{_lambda_.10} parent=0 // pred_fallthru
    _

// kernel: _lambda_.12
$region0: #{_lambda_.12}
  #allocation0 [shape = 'u32[]', space=smem, size = 0x4, offset = 0x4, fixed_abs, tag = 'smem constant byte address 0x4 - core index']
  #allocation1 [shape = 'u32[72,128]{1,0:T(1,128)}', space=vmem, size = 0x9000, scoped, tag = 'internal scratch']
  %s0 = inlined_call_operand.vmem [shape: bf16[32,128], index: 0, kind: input, shape index: {}]
  %s1 = inlined_call_operand.vmem [shape: f32[1,128], index: 1, kind: input, shape index: {}]
  %s2 = inlined_call_operand.vmem [shape: f32[1,128], index: 2, kind: input, shape index: {}]
  %s3 = inlined_call_operand.vmem [shape: bf16[32,128], index: 3, kind: output, shape index: {}]
  %s4 = sld [smem:[#allocation0]]
  $region22: #{_lambda_.12} parent=0
    _
  %s6 = ssub.s32 1, %s4
  %s7 = scalar_select 0, %s6, %s4
  // Predicated region
  $region2: #{_lambda_.12} parent=0 // pred_check
    _
  $region3: #{_lambda_.12} parent=0 // pred_check_branch
    %9 = sbr.rel (0) target = $region5
  $region4: #{_lambda_.12} parent=0 // pred_region
    _
  $region5: #{_lambda_.12} parent=0 // pred_fallthru
    _
  // Predicated region
  $region6: #{_lambda_.12} parent=0 // pred_check
    _
  $region7: #{_lambda_.12} parent=0 // pred_check_branch
    %11 = sbr.rel (0) target = $region9
  $region8: #{_lambda_.12} parent=0 // pred_region
    _
  $region9: #{_lambda_.12} parent=0 // pred_fallthru
    _
  // Predicated region
  $region10: #{_lambda_.12} parent=0 // pred_check
    _
  $region11: #{_lambda_.12} parent=0 // pred_check_branch
    %13 = sbr.rel (0) target = $region13
  $region12: #{_lambda_.12} parent=0 // pred_region
    _
  $region13: #{_lambda_.12} parent=0 // pred_fallthru
    _
  %v14 = vld [vmem:[%s0] sm:$0xf]
  %v15 = vld [vmem:[%s0 + $0x4] sm:$0xf]
  %v16 = vld [vmem:[%s0 + $0x8] sm:$0xf]
  %v17 = vld [vmem:[%s0 + $0xc] sm:$0xf]
  %v18 = vunpack.c.l.bf16 %v14
  %v19 = vunpack.c.l.bf16 %v15
  %v20 = vunpack.c.l.bf16 %v16
  %v21 = vunpack.c.l.bf16 %v17
  %v22 = vld [vmem:[%s1] sm:$0x1]
  %v24 = vperm.slane %v22, 0
  %v26 = vmul.f32 %v18, %v24
  %v27 = vmul.f32 %v19, %v24
  %v28 = vmul.f32 %v20, %v24
  %v29 = vmul.f32 %v21, %v24
  %v30 = vld [vmem:[%s2] sm:$0x1]
  %v32 = vperm.slane %v30, 0
  %v34 = vadd.f32 %v26, %v32
  %v35 = vadd.f32 %v27, %v32
  %v36 = vadd.f32 %v28, %v32
  %v37 = vadd.f32 %v29, %v32
  %vm38 = vcmp.gt.f32.partialorder %v34, 0.0
  %vm39 = vcmp.gt.f32.partialorder %v35, 0.0
  %vm40 = vcmp.gt.f32.partialorder %v36, 0.0
  %vm41 = vcmp.gt.f32.partialorder %v37, 0.0
  %v42 = vmul.f32 %v34, 0.2
  %v43 = vmul.f32 %v35, 0.2
  %v44 = vmul.f32 %v36, 0.2
  %v45 = vmul.f32 %v37, 0.2
  %v46 = vsel %vm38, %v34, %v42
  %v47 = vsel %vm39, %v35, %v43
  %v48 = vsel %vm40, %v36, %v44
  %v49 = vsel %vm41, %v37, %v45
  %v50 = vpack.c.bf16 %v46, %v46
  %v51 = vpack.c.bf16 %v47, %v47
  %v52 = vpack.c.bf16 %v48, %v48
  %v53 = vpack.c.bf16 %v49, %v49
  %54 = vst [vmem:[%s3] sm:$0xf] %v50
  %55 = vst [vmem:[%s3 + $0x4] sm:$0xf] %v51
  %56 = vst [vmem:[%s3 + $0x8] sm:$0xf] %v52
  %57 = vst [vmem:[%s3 + $0xc] sm:$0xf] %v53
  // Predicated region
  $region14: #{_lambda_.12} parent=0 // pred_check
    _
  $region15: #{_lambda_.12} parent=0 // pred_check_branch
    %59 = sbr.rel (0) target = $region17
  $region16: #{_lambda_.12} parent=0 // pred_region
    _
  $region17: #{_lambda_.12} parent=0 // pred_fallthru
    _
  // Predicated region
  $region18: #{_lambda_.12} parent=0 // pred_check
    _
  $region19: #{_lambda_.12} parent=0 // pred_check_branch
    %61 = sbr.rel (0) target = $region21
  $region20: #{_lambda_.12} parent=0 // pred_region
    _
  $region21: #{_lambda_.12} parent=0 // pred_fallthru
    _

// kernel: _lambda_.11
$region0: #{_lambda_.11}
  #allocation0 [shape = 'u32[]', space=smem, size = 0x4, offset = 0x4, fixed_abs, tag = 'smem constant byte address 0x4 - core index']
  #allocation1 [shape = 'u32[72,128]{1,0:T(1,128)}', space=vmem, size = 0x9000, scoped, tag = 'internal scratch']
  %s0 = inlined_call_operand.vmem [shape: bf16[32,256], index: 0, kind: input, shape index: {}]
  %s1 = inlined_call_operand.vmem [shape: bf16[256,128], index: 1, kind: input, shape index: {}]
  %s2 = inlined_call_operand.vmem [shape: bf16[32,128], index: 2, kind: output, shape index: {0}]
  %s3 = inlined_call_operand.vmem [shape: f32[1,2,128], index: 3, kind: output, shape index: {1}]
  %4 = xla_tuple %s2, %s3
  %s5 = sld [smem:[#allocation0]]
  $region26: #{_lambda_.11} parent=0
    _
  %s7 = ssub.s32 1, %s5
  %s8 = scalar_select 0, %s7, %s5
  // Predicated region
  $region2: #{_lambda_.11} parent=0 // pred_check
    _
  $region3: #{_lambda_.11} parent=0 // pred_check_branch
    %10 = sbr.rel (0) target = $region5
  $region4: #{_lambda_.11} parent=0 // pred_region
    _
  $region5: #{_lambda_.11} parent=0 // pred_fallthru
    _
  // Predicated region
  $region6: #{_lambda_.11} parent=0 // pred_check
    _
  $region7: #{_lambda_.11} parent=0 // pred_check_branch
    %12 = sbr.rel (0) target = $region9
  $region8: #{_lambda_.11} parent=0 // pred_region
    _
  $region9: #{_lambda_.11} parent=0 // pred_fallthru
    _
  %v13 = vld [vmem:[%s0] sm:$0xff]
  %v14 = vld [vmem:[%s0 + $0x8] sm:$0xff]
  %v15 = vld [vmem:[%s0 + $0x10] sm:$0xff]
  %v16 = vld [vmem:[%s0 + $0x18] sm:$0xff]
  %v17 = vld [vmem:[%s1] sm:$0xf]
  %v18 = vld [vmem:[%s1 + $0x4] sm:$0xf]
  %v19 = vld [vmem:[%s1 + $0x8] sm:$0xf]
  %v20 = vld [vmem:[%s1 + $0xc] sm:$0xf]
  %v21 = vld [vmem:[%s1 + $0x10] sm:$0xf]
  %v22 = vld [vmem:[%s1 + $0x14] sm:$0xf]
  %v23 = vld [vmem:[%s1 + $0x18] sm:$0xf]
  %v24 = vld [vmem:[%s1 + $0x1c] sm:$0xf]
  %v25 = vld [vmem:[%s1 + $0x20] sm:$0xf]
  %v26 = vld [vmem:[%s1 + $0x24] sm:$0xf]
  %v27 = vld [vmem:[%s1 + $0x28] sm:$0xf]
  %v28 = vld [vmem:[%s1 + $0x2c] sm:$0xf]
  %v29 = vld [vmem:[%s1 + $0x30] sm:$0xf]
  %v30 = vld [vmem:[%s1 + $0x34] sm:$0xf]
  %v31 = vld [vmem:[%s1 + $0x38] sm:$0xf]
  %v32 = vld [vmem:[%s1 + $0x3c] sm:$0xf]
  %v33 = vld [vmem:[%s1 + $0x40] sm:$0xf]
  %v34 = vld [vmem:[%s1 + $0x44] sm:$0xf]
  %v35 = vld [vmem:[%s1 + $0x48] sm:$0xf]
  %v36 = vld [vmem:[%s1 + $0x4c] sm:$0xf]
  %v37 = vld [vmem:[%s1 + $0x50] sm:$0xf]
  %v38 = vld [vmem:[%s1 + $0x54] sm:$0xf]
  %v39 = vld [vmem:[%s1 + $0x58] sm:$0xf]
  %v40 = vld [vmem:[%s1 + $0x5c] sm:$0xf]
  %v41 = vld [vmem:[%s1 + $0x60] sm:$0xf]
  %v42 = vld [vmem:[%s1 + $0x64] sm:$0xf]
  %v43 = vld [vmem:[%s1 + $0x68] sm:$0xf]
  %v44 = vld [vmem:[%s1 + $0x6c] sm:$0xf]
  %v45 = vld [vmem:[%s1 + $0x70] sm:$0xf]
  %v46 = vld [vmem:[%s1 + $0x74] sm:$0xf]
  %v47 = vld [vmem:[%s1 + $0x78] sm:$0xf]
  %v48 = vld [vmem:[%s1 + $0x7c] sm:$0xf]
  %v53 = vunpack.c.l.b16 %v13
  %v54 = vunpack.c.h.b16 %v13
  %v55 = vunpack.c.l.b16 %v14
  %v56 = vunpack.c.h.b16 %v14
  %v57 = vunpack.c.l.b16 %v15
  %v58 = vunpack.c.h.b16 %v15
  %v59 = vunpack.c.l.b16 %v16
  %v60 = vunpack.c.h.b16 %v16
  %v61 = vpack.c.b16 %v55, %v53
  %v62 = vpack.c.b16 %v56, %v54
  %v63 = vpack.c.b16 %v59, %v57
  %v64 = vpack.c.b16 %v60, %v58
  %v101 = vunpack.c.l.b16 %v17
  %v102 = vunpack.c.l.b16 %v18
  %v103 = vunpack.c.l.b16 %v19
  %v104 = vunpack.c.l.b16 %v20
  %v105 = vunpack.c.l.b16 %v21
  %v106 = vunpack.c.l.b16 %v22
  %v107 = vunpack.c.l.b16 %v23
  %v108 = vunpack.c.l.b16 %v24
  %v109 = vunpack.c.l.b16 %v25
  %v110 = vunpack.c.l.b16 %v26
  %v111 = vunpack.c.l.b16 %v27
  %v112 = vunpack.c.l.b16 %v28
  %v113 = vunpack.c.l.b16 %v29
  %v114 = vunpack.c.l.b16 %v30
  %v115 = vunpack.c.l.b16 %v31
  %v116 = vunpack.c.l.b16 %v32
  %v117 = vunpack.c.l.b16 %v33
  %v118 = vunpack.c.l.b16 %v34
  %v119 = vunpack.c.l.b16 %v35
  %v120 = vunpack.c.l.b16 %v36
  %v121 = vunpack.c.l.b16 %v37
  %v122 = vunpack.c.l.b16 %v38
  %v123 = vunpack.c.l.b16 %v39
  %v124 = vunpack.c.l.b16 %v40
  %v125 = vunpack.c.l.b16 %v41
  %v126 = vunpack.c.l.b16 %v42
  %v127 = vunpack.c.l.b16 %v43
  %v128 = vunpack.c.l.b16 %v44
  %v129 = vunpack.c.l.b16 %v45
  %v130 = vunpack.c.l.b16 %v46
  %v131 = vunpack.c.l.b16 %v47
  %v132 = vunpack.c.l.b16 %v48
  %v133 = vpack.c.b16 %v102, %v101
  %v134 = vpack.c.b16 %v104, %v103
  %v135 = vpack.c.b16 %v106, %v105
  %v136 = vpack.c.b16 %v108, %v107
  %v137 = vpack.c.b16 %v110, %v109
  %v138 = vpack.c.b16 %v112, %v111
  %v139 = vpack.c.b16 %v114, %v113
  %v140 = vpack.c.b16 %v116, %v115
  %v141 = vpack.c.b16 %v118, %v117
  %v142 = vpack.c.b16 %v120, %v119
  %v143 = vpack.c.b16 %v122, %v121
  %v144 = vpack.c.b16 %v124, %v123
  %v145 = vpack.c.b16 %v126, %v125
  %v146 = vpack.c.b16 %v128, %v127
  %v147 = vpack.c.b16 %v130, %v129
  %v148 = vpack.c.b16 %v132, %v131
  %165 = vmatpush.bf16.msra.mxu0 %v140
  %166 = vmatpush.bf16.msra.mxu0 %v139
  %167 = vmatpush.bf16.msra.mxu0 %v138
  %168 = vmatpush.bf16.msra.mxu0 %v137
  %169 = vmatpush.bf16.msra.mxu0 %v136
  %170 = vmatpush.bf16.msra.mxu0 %v135
  %171 = vmatpush.bf16.msra.mxu0 %v134
  %172 = vmatpush.bf16.msra.mxu0 %v133
  %173 = vmatmul.bf16.gmra.mxu0 %v61
  %v174 = vpop.f32.mrf.mxu0
  %v175 = vadd.f32 0.0, %v174
  %v176 = vpop.f32.mrf.mxu0
  %v177 = vadd.f32 0.0, %v176
  %178 = vmatmul.bf16.gmra.mxu0 %v63
  %v179 = vpop.f32.mrf.mxu0
  %v180 = vadd.f32 0.0, %v179
  %v181 = vpop.f32.mrf.mxu0
  %v182 = vadd.f32 0.0, %v181
  %183 = vdwg.mxu0
  %184 = vmatpush.bf16.msra.mxu0 %v148
  %185 = vmatpush.bf16.msra.mxu0 %v147
  %186 = vmatpush.bf16.msra.mxu0 %v146
  %187 = vmatpush.bf16.msra.mxu0 %v145
  %188 = vmatpush.bf16.msra.mxu0 %v144
  %189 = vmatpush.bf16.msra.mxu0 %v143
  %190 = vmatpush.bf16.msra.mxu0 %v142
  %191 = vmatpush.bf16.msra.mxu0 %v141
  %192 = vmatmul.bf16.gmra.mxu0 %v62
  %v193 = vpop.f32.mrf.mxu0
  %v194 = vadd.f32 %v175, %v193
  %v195 = vpop.f32.mrf.mxu0
  %v196 = vadd.f32 %v177, %v195
  %197 = vmatmul.bf16.gmra.mxu0 %v64
  %v198 = vpop.f32.mrf.mxu0
  %v199 = vadd.f32 %v180, %v198
  %v200 = vpop.f32.mrf.mxu0
  %v201 = vadd.f32 %v182, %v200
  %202 = vdwg.mxu0
  %v203 = vpack.c.bf16 %v194, %v194
  %v204 = vpack.c.bf16 %v196, %v196
  %v205 = vpack.c.bf16 %v199, %v199
  %v206 = vpack.c.bf16 %v201, %v201
  %207 = vst [vmem:[%s2] sm:$0xf] %v203
  %208 = vst [vmem:[%s2 + $0x4] sm:$0xf] %v204
  %209 = vst [vmem:[%s2 + $0x8] sm:$0xf] %v205
  %210 = vst [vmem:[%s2 + $0xc] sm:$0xf] %v206
  %v211 = vadd.f32 %v194, %v196
  %v212 = vadd.f32 %v211, %v199
  %v213 = vadd.f32 %v212, %v201
  %v214 = vrot.slane %v213, 4
  %v215 = vadd.f32 %v213, %v214
  %v216 = vrot.slane %v215, 2
  %v217 = vadd.f32 %v215, %v216
  %v218 = vrot.slane %v217, 1
  %v219 = vadd.f32 %v217, %v218
  %220 = vst [vmem:[%s3] sm:$0x1] %v219
  %v221 = vmul.f32 %v194, %v194
  %v222 = vmul.f32 %v196, %v196
  %v223 = vmul.f32 %v199, %v199
  %v224 = vmul.f32 %v201, %v201
  %v225 = vadd.f32 %v221, %v222
  %v226 = vadd.f32 %v225, %v223
  %v227 = vadd.f32 %v226, %v224
  %v228 = vrot.slane %v227, 4
  %v229 = vadd.f32 %v227, %v228
  %v230 = vrot.slane %v229, 2
  %v231 = vadd.f32 %v229, %v230
  %v232 = vrot.slane %v231, 1
  %v233 = vadd.f32 %v231, %v232
  %234 = vst [vmem:[%s3 + $0x1] sm:$0x1] %v233
  // Predicated region
  $region10: #{_lambda_.11} parent=0 // pred_check
    _
  $region11: #{_lambda_.11} parent=0 // pred_check_branch
    %236 = sbr.rel (0) target = $region13
  $region12: #{_lambda_.11} parent=0 // pred_region
    _
  $region13: #{_lambda_.11} parent=0 // pred_fallthru
    _
  // Predicated region
  $region14: #{_lambda_.11} parent=0 // pred_check
    _
  $region15: #{_lambda_.11} parent=0 // pred_check_branch
    %238 = sbr.rel (0) target = $region17
  $region16: #{_lambda_.11} parent=0 // pred_region
    _
  $region17: #{_lambda_.11} parent=0 // pred_fallthru
    _
  // Predicated region
  $region18: #{_lambda_.11} parent=0 // pred_check
    _
  $region19: #{_lambda_.11} parent=0 // pred_check_branch
    %240 = sbr.rel (0) target = $region21
  $region20: #{_lambda_.11} parent=0 // pred_region
    _
  $region21: #{_lambda_.11} parent=0 // pred_fallthru
    _
  // Predicated region
  $region22: #{_lambda_.11} parent=0 // pred_check
    _
  $region23: #{_lambda_.11} parent=0 // pred_check_branch
    %242 = sbr.rel (0) target = $region25
  $region24: #{_lambda_.11} parent=0 // pred_region
    _
  $region25: #{_lambda_.11} parent=0 // pred_fallthru
    _

// kernel: _lambda_.13
$region0: #{_lambda_.13}
  #allocation0 [shape = 'u32[]', space=smem, size = 0x4, offset = 0x4, fixed_abs, tag = 'smem constant byte address 0x4 - core index']
  #allocation1 [shape = 'u32[72,128]{1,0:T(1,128)}', space=vmem, size = 0x9000, scoped, tag = 'internal scratch']
  %s0 = inlined_call_operand.vmem [shape: bf16[32,512], index: 0, kind: input, shape index: {}]
  %s1 = inlined_call_operand.vmem [shape: bf16[512,128], index: 1, kind: input, shape index: {}]
  %s2 = inlined_call_operand.vmem [shape: bf16[32,128], index: 2, kind: output, shape index: {0}]
  %s3 = inlined_call_operand.vmem [shape: f32[1,2,128], index: 3, kind: output, shape index: {1}]
  %4 = xla_tuple %s2, %s3
  %s5 = sld [smem:[#allocation0]]
  $region26: #{_lambda_.13} parent=0
    _
  %s7 = ssub.s32 1, %s5
  %s8 = scalar_select 0, %s7, %s5
  // Predicated region
  $region2: #{_lambda_.13} parent=0 // pred_check
    _
  $region3: #{_lambda_.13} parent=0 // pred_check_branch
    %10 = sbr.rel (0) target = $region5
  $region4: #{_lambda_.13} parent=0 // pred_region
    _
  $region5: #{_lambda_.13} parent=0 // pred_fallthru
    _
  // Predicated region
  $region6: #{_lambda_.13} parent=0 // pred_check
    _
  $region7: #{_lambda_.13} parent=0 // pred_check_branch
    %12 = sbr.rel (0) target = $region9
  $region8: #{_lambda_.13} parent=0 // pred_region
    _
  $region9: #{_lambda_.13} parent=0 // pred_fallthru
    _
  %v13 = vld [vmem:[%s0] sm:$0xff]
  %v14 = vld [vmem:[%s0 + $0x8] sm:$0xff]
  %v15 = vld [vmem:[%s0 + $0x10] sm:$0xff]
  %v16 = vld [vmem:[%s0 + $0x18] sm:$0xff]
  %v17 = vld [vmem:[%s0 + $0x20] sm:$0xff]
  %v18 = vld [vmem:[%s0 + $0x28] sm:$0xff]
  %v19 = vld [vmem:[%s0 + $0x30] sm:$0xff]
  %v20 = vld [vmem:[%s0 + $0x38] sm:$0xff]
  %v21 = vld [vmem:[%s1] sm:$0xf]
  %v22 = vld [vmem:[%s1 + $0x4] sm:$0xf]
  %v23 = vld [vmem:[%s1 + $0x8] sm:$0xf]
  %v24 = vld [vmem:[%s1 + $0xc] sm:$0xf]
  %v25 = vld [vmem:[%s1 + $0x10] sm:$0xf]
  %v26 = vld [vmem:[%s1 + $0x14] sm:$0xf]
  %v27 = vld [vmem:[%s1 + $0x18] sm:$0xf]
  %v28 = vld [vmem:[%s1 + $0x1c] sm:$0xf]
  %v29 = vld [vmem:[%s1 + $0x20] sm:$0xf]
  %v30 = vld [vmem:[%s1 + $0x24] sm:$0xf]
  %v31 = vld [vmem:[%s1 + $0x28] sm:$0xf]
  %v32 = vld [vmem:[%s1 + $0x2c] sm:$0xf]
  %v33 = vld [vmem:[%s1 + $0x30] sm:$0xf]
  %v34 = vld [vmem:[%s1 + $0x34] sm:$0xf]
  %v35 = vld [vmem:[%s1 + $0x38] sm:$0xf]
  %v36 = vld [vmem:[%s1 + $0x3c] sm:$0xf]
  %v37 = vld [vmem:[%s1 + $0x40] sm:$0xf]
  %v38 = vld [vmem:[%s1 + $0x44] sm:$0xf]
  %v39 = vld [vmem:[%s1 + $0x48] sm:$0xf]
  %v40 = vld [vmem:[%s1 + $0x4c] sm:$0xf]
  %v41 = vld [vmem:[%s1 + $0x50] sm:$0xf]
  %v42 = vld [vmem:[%s1 + $0x54] sm:$0xf]
  %v43 = vld [vmem:[%s1 + $0x58] sm:$0xf]
  %v44 = vld [vmem:[%s1 + $0x5c] sm:$0xf]
  %v45 = vld [vmem:[%s1 + $0x60] sm:$0xf]
  %v46 = vld [vmem:[%s1 + $0x64] sm:$0xf]
  %v47 = vld [vmem:[%s1 + $0x68] sm:$0xf]
  %v48 = vld [vmem:[%s1 + $0x6c] sm:$0xf]
  %v49 = vld [vmem:[%s1 + $0x70] sm:$0xf]
  %v50 = vld [vmem:[%s1 + $0x74] sm:$0xf]
  %v51 = vld [vmem:[%s1 + $0x78] sm:$0xf]
  %v52 = vld [vmem:[%s1 + $0x7c] sm:$0xf]
  %v53 = vld [vmem:[%s1 + $0x80] sm:$0xf]
  %v54 = vld [vmem:[%s1 + $0x84] sm:$0xf]
  %v55 = vld [vmem:[%s1 + $0x88] sm:$0xf]
  %v56 = vld [vmem:[%s1 + $0x8c] sm:$0xf]
  %v57 = vld [vmem:[%s1 + $0x90] sm:$0xf]
  %v58 = vld [vmem:[%s1 + $0x94] sm:$0xf]
  %v59 = vld [vmem:[%s1 + $0x98] sm:$0xf]
  %v60 = vld [vmem:[%s1 + $0x9c] sm:$0xf]
  %v61 = vld [vmem:[%s1 + $0xa0] sm:$0xf]
  %v62 = vld [vmem:[%s1 + $0xa4] sm:$0xf]
  %v63 = vld [vmem:[%s1 + $0xa8] sm:$0xf]
  %v64 = vld [vmem:[%s1 + $0xac] sm:$0xf]
  %v65 = vld [vmem:[%s1 + $0xb0] sm:$0xf]
  %v66 = vld [vmem:[%s1 + $0xb4] sm:$0xf]
  %v67 = vld [vmem:[%s1 + $0xb8] sm:$0xf]
  %v68 = vld [vmem:[%s1 + $0xbc] sm:$0xf]
  %v69 = vld [vmem:[%s1 + $0xc0] sm:$0xf]
  %v70 = vld [vmem:[%s1 + $0xc4] sm:$0xf]
  %v71 = vld [vmem:[%s1 + $0xc8] sm:$0xf]
  %v72 = vld [vmem:[%s1 + $0xcc] sm:$0xf]
  %v73 = vld [vmem:[%s1 + $0xd0] sm:$0xf]
  %v74 = vld [vmem:[%s1 + $0xd4] sm:$0xf]
  %v75 = vld [vmem:[%s1 + $0xd8] sm:$0xf]
  %v76 = vld [vmem:[%s1 + $0xdc] sm:$0xf]
  %v77 = vld [vmem:[%s1 + $0xe0] sm:$0xf]
  %v78 = vld [vmem:[%s1 + $0xe4] sm:$0xf]
  %v79 = vld [vmem:[%s1 + $0xe8] sm:$0xf]
  %v80 = vld [vmem:[%s1 + $0xec] sm:$0xf]
  %v81 = vld [vmem:[%s1 + $0xf0] sm:$0xf]
  %v82 = vld [vmem:[%s1 + $0xf4] sm:$0xf]
  %v83 = vld [vmem:[%s1 + $0xf8] sm:$0xf]
  %v84 = vld [vmem:[%s1 + $0xfc] sm:$0xf]
  %v93 = vunpack.c.l.b16 %v13
  %v94 = vunpack.c.h.b16 %v13
  %v95 = vunpack.c.l.b16 %v14
  %v96 = vunpack.c.h.b16 %v14
  %v97 = vunpack.c.l.b16 %v15
  %v98 = vunpack.c.h.b16 %v15
  %v99 = vunpack.c.l.b16 %v16
  %v100 = vunpack.c.h.b16 %v16
  %v101 = vunpack.c.l.b16 %v17
  %v102 = vunpack.c.h.b16 %v17
  %v103 = vunpack.c.l.b16 %v18
  %v104 = vunpack.c.h.b16 %v18
  %v105 = vunpack.c.l.b16 %v19
  %v106 = vunpack.c.h.b16 %v19
  %v107 = vunpack.c.l.b16 %v20
  %v108 = vunpack.c.h.b16 %v20
  %v109 = vpack.c.b16 %v97, %v93
  %v110 = vpack.c.b16 %v98, %v94
  %v111 = vpack.c.b16 %v99, %v95
  %v112 = vpack.c.b16 %v100, %v96
  %v113 = vpack.c.b16 %v105, %v101
  %v114 = vpack.c.b16 %v106, %v102
  %v115 = vpack.c.b16 %v107, %v103
  %v116 = vpack.c.b16 %v108, %v104
  %v189 = vunpack.c.l.b16 %v21
  %v190 = vunpack.c.l.b16 %v22
  %v191 = vunpack.c.l.b16 %v23
  %v192 = vunpack.c.l.b16 %v24
  %v193 = vunpack.c.l.b16 %v25
  %v194 = vunpack.c.l.b16 %v26
  %v195 = vunpack.c.l.b16 %v27
  %v196 = vunpack.c.l.b16 %v28
  %v197 = vunpack.c.l.b16 %v29
  %v198 = vunpack.c.l.b16 %v30
  %v199 = vunpack.c.l.b16 %v31
  %v200 = vunpack.c.l.b16 %v32
  %v201 = vunpack.c.l.b16 %v33
  %v202 = vunpack.c.l.b16 %v34
  %v203 = vunpack.c.l.b16 %v35
  %v204 = vunpack.c.l.b16 %v36
  %v205 = vunpack.c.l.b16 %v37
  %v206 = vunpack.c.l.b16 %v38
  %v207 = vunpack.c.l.b16 %v39
  %v208 = vunpack.c.l.b16 %v40
  %v209 = vunpack.c.l.b16 %v41
  %v210 = vunpack.c.l.b16 %v42
  %v211 = vunpack.c.l.b16 %v43
  %v212 = vunpack.c.l.b16 %v44
  %v213 = vunpack.c.l.b16 %v45
  %v214 = vunpack.c.l.b16 %v46
  %v215 = vunpack.c.l.b16 %v47
  %v216 = vunpack.c.l.b16 %v48
  %v217 = vunpack.c.l.b16 %v49
  %v218 = vunpack.c.l.b16 %v50
  %v219 = vunpack.c.l.b16 %v51
  %v220 = vunpack.c.l.b16 %v52
  %v221 = vunpack.c.l.b16 %v53
  %v222 = vunpack.c.l.b16 %v54
  %v223 = vunpack.c.l.b16 %v55
  %v224 = vunpack.c.l.b16 %v56
  %v225 = vunpack.c.l.b16 %v57
  %v226 = vunpack.c.l.b16 %v58
  %v227 = vunpack.c.l.b16 %v59
  %v228 = vunpack.c.l.b16 %v60
  %v229 = vunpack.c.l.b16 %v61
  %v230 = vunpack.c.l.b16 %v62
  %v231 = vunpack.c.l.b16 %v63
  %v232 = vunpack.c.l.b16 %v64
  %v233 = vunpack.c.l.b16 %v65
  %v234 = vunpack.c.l.b16 %v66
  %v235 = vunpack.c.l.b16 %v67
  %v236 = vunpack.c.l.b16 %v68
  %v237 = vunpack.c.l.b16 %v69
  %v238 = vunpack.c.l.b16 %v70
  %v239 = vunpack.c.l.b16 %v71
  %v240 = vunpack.c.l.b16 %v72
  %v241 = vunpack.c.l.b16 %v73
  %v242 = vunpack.c.l.b16 %v74
  %v243 = vunpack.c.l.b16 %v75
  %v244 = vunpack.c.l.b16 %v76
  %v245 = vunpack.c.l.b16 %v77
  %v246 = vunpack.c.l.b16 %v78
  %v247 = vunpack.c.l.b16 %v79
  %v248 = vunpack.c.l.b16 %v80
  %v249 = vunpack.c.l.b16 %v81
  %v250 = vunpack.c.l.b16 %v82
  %v251 = vunpack.c.l.b16 %v83
  %v252 = vunpack.c.l.b16 %v84
  %v253 = vpack.c.b16 %v190, %v189
  %v254 = vpack.c.b16 %v192, %v191
  %v255 = vpack.c.b16 %v194, %v193
  %v256 = vpack.c.b16 %v196, %v195
  %v257 = vpack.c.b16 %v198, %v197
  %v258 = vpack.c.b16 %v200, %v199
  %v259 = vpack.c.b16 %v202, %v201
  %v260 = vpack.c.b16 %v204, %v203
  %v261 = vpack.c.b16 %v206, %v205
  %v262 = vpack.c.b16 %v208, %v207
  %v263 = vpack.c.b16 %v210, %v209
  %v264 = vpack.c.b16 %v212, %v211
  %v265 = vpack.c.b16 %v214, %v213
  %v266 = vpack.c.b16 %v216, %v215
  %v267 = vpack.c.b16 %v218, %v217
  %v268 = vpack.c.b16 %v220, %v219
  %v269 = vpack.c.b16 %v222, %v221
  %v270 = vpack.c.b16 %v224, %v223
  %v271 = vpack.c.b16 %v226, %v225
  %v272 = vpack.c.b16 %v228, %v227
  %v273 = vpack.c.b16 %v230, %v229
  %v274 = vpack.c.b16 %v232, %v231
  %v275 = vpack.c.b16 %v234, %v233
  %v276 = vpack.c.b16 %v236, %v235
  %v277 = vpack.c.b16 %v238, %v237
  %v278 = vpack.c.b16 %v240, %v239
  %v279 = vpack.c.b16 %v242, %v241
  %v280 = vpack.c.b16 %v244, %v243
  %v281 = vpack.c.b16 %v246, %v245
  %v282 = vpack.c.b16 %v248, %v247
  %v283 = vpack.c.b16 %v250, %v249
  %v284 = vpack.c.b16 %v252, %v251
  %317 = vmatpush.bf16.msra.mxu0 %v260
  %318 = vmatpush.bf16.msra.mxu0 %v259
  %319 = vmatpush.bf16.msra.mxu0 %v258
  %320 = vmatpush.bf16.msra.mxu0 %v257
  %321 = vmatpush.bf16.msra.mxu0 %v256
  %322 = vmatpush.bf16.msra.mxu0 %v255
  %323 = vmatpush.bf16.msra.mxu0 %v254
  %324 = vmatpush.bf16.msra.mxu0 %v253
  %325 = vmatmul.bf16.gmra.mxu0 %v109
  %v326 = vpop.f32.mrf.mxu0
  %v327 = vadd.f32 0.0, %v326
  %v328 = vpop.f32.mrf.mxu0
  %v329 = vadd.f32 0.0, %v328
  %330 = vmatmul.bf16.gmra.mxu0 %v113
  %v331 = vpop.f32.mrf.mxu0
  %v332 = vadd.f32 0.0, %v331
  %v333 = vpop.f32.mrf.mxu0
  %v334 = vadd.f32 0.0, %v333
  %335 = vdwg.mxu0
  %336 = vmatpush.bf16.msra.mxu0 %v268
  %337 = vmatpush.bf16.msra.mxu0 %v267
  %338 = vmatpush.bf16.msra.mxu0 %v266
  %339 = vmatpush.bf16.msra.mxu0 %v265
  %340 = vmatpush.bf16.msra.mxu0 %v264
  %341 = vmatpush.bf16.msra.mxu0 %v263
  %342 = vmatpush.bf16.msra.mxu0 %v262
  %343 = vmatpush.bf16.msra.mxu0 %v261
  %344 = vmatmul.bf16.gmra.mxu0 %v110
  %v345 = vpop.f32.mrf.mxu0
  %v346 = vadd.f32 %v327, %v345
  %v347 = vpop.f32.mrf.mxu0
  %v348 = vadd.f32 %v329, %v347
  %349 = vmatmul.bf16.gmra.mxu0 %v114
  %v350 = vpop.f32.mrf.mxu0
  %v351 = vadd.f32 %v332, %v350
  %v352 = vpop.f32.mrf.mxu0
  %v353 = vadd.f32 %v334, %v352
  %354 = vdwg.mxu0
  %355 = vmatpush.bf16.msra.mxu0 %v276
  %356 = vmatpush.bf16.msra.mxu0 %v275
  %357 = vmatpush.bf16.msra.mxu0 %v274
  %358 = vmatpush.bf16.msra.mxu0 %v273
  %359 = vmatpush.bf16.msra.mxu0 %v272
  %360 = vmatpush.bf16.msra.mxu0 %v271
  %361 = vmatpush.bf16.msra.mxu0 %v270
  %362 = vmatpush.bf16.msra.mxu0 %v269
  %363 = vmatmul.bf16.gmra.mxu0 %v111
  %v364 = vpop.f32.mrf.mxu0
  %v365 = vadd.f32 %v346, %v364
  %v366 = vpop.f32.mrf.mxu0
  %v367 = vadd.f32 %v348, %v366
  %368 = vmatmul.bf16.gmra.mxu0 %v115
  %v369 = vpop.f32.mrf.mxu0
  %v370 = vadd.f32 %v351, %v369
  %v371 = vpop.f32.mrf.mxu0
  %v372 = vadd.f32 %v353, %v371
  %373 = vdwg.mxu0
  %374 = vmatpush.bf16.msra.mxu0 %v284
  %375 = vmatpush.bf16.msra.mxu0 %v283
  %376 = vmatpush.bf16.msra.mxu0 %v282
  %377 = vmatpush.bf16.msra.mxu0 %v281
  %378 = vmatpush.bf16.msra.mxu0 %v280
  %379 = vmatpush.bf16.msra.mxu0 %v279
  %380 = vmatpush.bf16.msra.mxu0 %v278
  %381 = vmatpush.bf16.msra.mxu0 %v277
  %382 = vmatmul.bf16.gmra.mxu0 %v112
  %v383 = vpop.f32.mrf.mxu0
  %v384 = vadd.f32 %v365, %v383
  %v385 = vpop.f32.mrf.mxu0
  %v386 = vadd.f32 %v367, %v385
  %387 = vmatmul.bf16.gmra.mxu0 %v116
  %v388 = vpop.f32.mrf.mxu0
  %v389 = vadd.f32 %v370, %v388
  %v390 = vpop.f32.mrf.mxu0
  %v391 = vadd.f32 %v372, %v390
  %392 = vdwg.mxu0
  %v393 = vpack.c.bf16 %v384, %v384
  %v394 = vpack.c.bf16 %v386, %v386
  %v395 = vpack.c.bf16 %v389, %v389
  %v396 = vpack.c.bf16 %v391, %v391
  %397 = vst [vmem:[%s2] sm:$0xf] %v393
  %398 = vst [vmem:[%s2 + $0x4] sm:$0xf] %v394
  %399 = vst [vmem:[%s2 + $0x8] sm:$0xf] %v395
  %400 = vst [vmem:[%s2 + $0xc] sm:$0xf] %v396
  %v401 = vadd.f32 %v384, %v386
  %v402 = vadd.f32 %v401, %v389
  %v403 = vadd.f32 %v402, %v391
  %v404 = vrot.slane %v403, 4
  %v405 = vadd.f32 %v403, %v404
  %v406 = vrot.slane %v405, 2
  %v407 = vadd.f32 %v405, %v406
  %v408 = vrot.slane %v407, 1
  %v409 = vadd.f32 %v407, %v408
  %410 = vst [vmem:[%s3] sm:$0x1] %v409
  %v411 = vmul.f32 %v384, %v384
  %v412 = vmul.f32 %v386, %v386
  %v413 = vmul.f32 %v389, %v389
  %v414 = vmul.f32 %v391, %v391
  %v415 = vadd.f32 %v411, %v412
  %v416 = vadd.f32 %v415, %v413
  %v417 = vadd.f32 %v416, %v414
  %v418 = vrot.slane %v417, 4
  %v419 = vadd.f32 %v417, %v418
  %v420 = vrot.slane %v419, 2
  %v421 = vadd.f32 %v419, %v420
  %v422 = vrot.slane %v421, 1
  %v423 = vadd.f32 %v421, %v422
  %424 = vst [vmem:[%s3 + $0x1] sm:$0x1] %v423
  // Predicated region
  $region10: #{_lambda_.13} parent=0 // pred_check
    _
  $region11: #{_lambda_.13} parent=0 // pred_check_branch
    %426 = sbr.rel (0) target = $region13
  $region12: #{_lambda_.13} parent=0 // pred_region
    _
  $region13: #{_lambda_.13} parent=0 // pred_fallthru
    _
  // Predicated region
  $region14: #{_lambda_.13} parent=0 // pred_check
    _
  $region15: #{_lambda_.13} parent=0 // pred_check_branch
    %428 = sbr.rel (0) target = $region17
  $region16: #{_lambda_.13} parent=0 // pred_region
    _
  $region17: #{_lambda_.13} parent=0 // pred_fallthru
    _
  // Predicated region
  $region18: #{_lambda_.13} parent=0 // pred_check
    _
  $region19: #{_lambda_.13} parent=0 // pred_check_branch
    %430 = sbr.rel (0) target = $region21
  $region20: #{_lambda_.13} parent=0 // pred_region
    _
  $region21: #{_lambda_.13} parent=0 // pred_fallthru
    _
  // Predicated region
  $region22: #{_lambda_.13} parent=0 // pred_check
    _
  $region23: #{_lambda_.13} parent=0 // pred_check_branch
    %432 = sbr.rel (0) target = $region25
  $region24: #{_lambda_.13} parent=0 // pred_region
    _
  $region25: #{_lambda_.13} parent=0 // pred_fallthru
    _

// kernel: _lambda_.15
$region0: #{_lambda_.15}
  #allocation0 [shape = 'u32[]', space=smem, size = 0x4, offset = 0x4, fixed_abs, tag = 'smem constant byte address 0x4 - core index']
  #allocation1 [shape = 'u32[72,128]{1,0:T(1,128)}', space=vmem, size = 0x9000, scoped, tag = 'internal scratch']
  %s0 = inlined_call_operand.vmem [shape: bf16[16,1024], index: 0, kind: input, shape index: {}]
  %s1 = inlined_call_operand.vmem [shape: bf16[1024,128], index: 1, kind: input, shape index: {}]
  %s2 = inlined_call_operand.vmem [shape: f32[1,128], index: 2, kind: input, shape index: {}]
  %s3 = inlined_call_operand.vmem [shape: f32[16,128], index: 3, kind: output, shape index: {}]
  %s4 = sld [smem:[#allocation0]]
  $region22: #{_lambda_.15} parent=0
    _
  %s6 = ssub.s32 1, %s4
  %s7 = scalar_select 0, %s6, %s4
  // Predicated region
  $region2: #{_lambda_.15} parent=0 // pred_check
    _
  $region3: #{_lambda_.15} parent=0 // pred_check_branch
    %9 = sbr.rel (0) target = $region5
  $region4: #{_lambda_.15} parent=0 // pred_region
    _
  $region5: #{_lambda_.15} parent=0 // pred_fallthru
    _
  // Predicated region
  $region6: #{_lambda_.15} parent=0 // pred_check
    _
  $region7: #{_lambda_.15} parent=0 // pred_check_branch
    %11 = sbr.rel (0) target = $region9
  $region8: #{_lambda_.15} parent=0 // pred_region
    _
  $region9: #{_lambda_.15} parent=0 // pred_fallthru
    _
  // Predicated region
  $region10: #{_lambda_.15} parent=0 // pred_check
    _
  $region11: #{_lambda_.15} parent=0 // pred_check_branch
    %13 = sbr.rel (0) target = $region13
  $region12: #{_lambda_.15} parent=0 // pred_region
    _
  $region13: #{_lambda_.15} parent=0 // pred_fallthru
    _
  %v14 = vld [vmem:[%s0] sm:$0xff]
  %v15 = vld [vmem:[%s0 + $0x8] sm:$0xff]
  %v16 = vld [vmem:[%s0 + $0x10] sm:$0xff]
  %v17 = vld [vmem:[%s0 + $0x18] sm:$0xff]
  %v18 = vld [vmem:[%s0 + $0x20] sm:$0xff]
  %v19 = vld [vmem:[%s0 + $0x28] sm:$0xff]
  %v20 = vld [vmem:[%s0 + $0x30] sm:$0xff]
  %v21 = vld [vmem:[%s0 + $0x38] sm:$0xff]
  %v22 = vld [vmem:[%s1] sm:$0xf]
  %v23 = vld [vmem:[%s1 + $0x4] sm:$0xf]
  %v24 = vld [vmem:[%s1 + $0x8] sm:$0xf]
  %v25 = vld [vmem:[%s1 + $0xc] sm:$0xf]
  %v26 = vld [vmem:[%s1 + $0x10] sm:$0xf]
  %v27 = vld [vmem:[%s1 + $0x14] sm:$0xf]
  %v28 = vld [vmem:[%s1 + $0x18] sm:$0xf]
  %v29 = vld [vmem:[%s1 + $0x1c] sm:$0xf]
  %v30 = vld [vmem:[%s1 + $0x20] sm:$0xf]
  %v31 = vld [vmem:[%s1 + $0x24] sm:$0xf]
  %v32 = vld [vmem:[%s1 + $0x28] sm:$0xf]
  %v33 = vld [vmem:[%s1 + $0x2c] sm:$0xf]
  %v34 = vld [vmem:[%s1 + $0x30] sm:$0xf]
  %v35 = vld [vmem:[%s1 + $0x34] sm:$0xf]
  %v36 = vld [vmem:[%s1 + $0x38] sm:$0xf]
  %v37 = vld [vmem:[%s1 + $0x3c] sm:$0xf]
  %v38 = vld [vmem:[%s1 + $0x40] sm:$0xf]
  %v39 = vld [vmem:[%s1 + $0x44] sm:$0xf]
  %v40 = vld [vmem:[%s1 + $0x48] sm:$0xf]
  %v41 = vld [vmem:[%s1 + $0x4c] sm:$0xf]
  %v42 = vld [vmem:[%s1 + $0x50] sm:$0xf]
  %v43 = vld [vmem:[%s1 + $0x54] sm:$0xf]
  %v44 = vld [vmem:[%s1 + $0x58] sm:$0xf]
  %v45 = vld [vmem:[%s1 + $0x5c] sm:$0xf]
  %v46 = vld [vmem:[%s1 + $0x60] sm:$0xf]
  %v47 = vld [vmem:[%s1 + $0x64] sm:$0xf]
  %v48 = vld [vmem:[%s1 + $0x68] sm:$0xf]
  %v49 = vld [vmem:[%s1 + $0x6c] sm:$0xf]
  %v50 = vld [vmem:[%s1 + $0x70] sm:$0xf]
  %v51 = vld [vmem:[%s1 + $0x74] sm:$0xf]
  %v52 = vld [vmem:[%s1 + $0x78] sm:$0xf]
  %v53 = vld [vmem:[%s1 + $0x7c] sm:$0xf]
  %v54 = vld [vmem:[%s1 + $0x80] sm:$0xf]
  %v55 = vld [vmem:[%s1 + $0x84] sm:$0xf]
  %v56 = vld [vmem:[%s1 + $0x88] sm:$0xf]
  %v57 = vld [vmem:[%s1 + $0x8c] sm:$0xf]
  %v58 = vld [vmem:[%s1 + $0x90] sm:$0xf]
  %v59 = vld [vmem:[%s1 + $0x94] sm:$0xf]
  %v60 = vld [vmem:[%s1 + $0x98] sm:$0xf]
  %v61 = vld [vmem:[%s1 + $0x9c] sm:$0xf]
  %v62 = vld [vmem:[%s1 + $0xa0] sm:$0xf]
  %v63 = vld [vmem:[%s1 + $0xa4] sm:$0xf]
  %v64 = vld [vmem:[%s1 + $0xa8] sm:$0xf]
  %v65 = vld [vmem:[%s1 + $0xac] sm:$0xf]
  %v66 = vld [vmem:[%s1 + $0xb0] sm:$0xf]
  %v67 = vld [vmem:[%s1 + $0xb4] sm:$0xf]
  %v68 = vld [vmem:[%s1 + $0xb8] sm:$0xf]
  %v69 = vld [vmem:[%s1 + $0xbc] sm:$0xf]
  %v70 = vld [vmem:[%s1 + $0xc0] sm:$0xf]
  %v71 = vld [vmem:[%s1 + $0xc4] sm:$0xf]
  %v72 = vld [vmem:[%s1 + $0xc8] sm:$0xf]
  %v73 = vld [vmem:[%s1 + $0xcc] sm:$0xf]
  %v74 = vld [vmem:[%s1 + $0xd0] sm:$0xf]
  %v75 = vld [vmem:[%s1 + $0xd4] sm:$0xf]
  %v76 = vld [vmem:[%s1 + $0xd8] sm:$0xf]
  %v77 = vld [vmem:[%s1 + $0xdc] sm:$0xf]
  %v78 = vld [vmem:[%s1 + $0xe0] sm:$0xf]
  %v79 = vld [vmem:[%s1 + $0xe4] sm:$0xf]
  %v80 = vld [vmem:[%s1 + $0xe8] sm:$0xf]
  %v81 = vld [vmem:[%s1 + $0xec] sm:$0xf]
  %v82 = vld [vmem:[%s1 + $0xf0] sm:$0xf]
  %v83 = vld [vmem:[%s1 + $0xf4] sm:$0xf]
  %v84 = vld [vmem:[%s1 + $0xf8] sm:$0xf]
  %v85 = vld [vmem:[%s1 + $0xfc] sm:$0xf]
  %v86 = vld [vmem:[%s1 + $0x100] sm:$0xf]
  %v87 = vld [vmem:[%s1 + $0x104] sm:$0xf]
  %v88 = vld [vmem:[%s1 + $0x108] sm:$0xf]
  %v89 = vld [vmem:[%s1 + $0x10c] sm:$0xf]
  %v90 = vld [vmem:[%s1 + $0x110] sm:$0xf]
  %v91 = vld [vmem:[%s1 + $0x114] sm:$0xf]
  %v92 = vld [vmem:[%s1 + $0x118] sm:$0xf]
  %v93 = vld [vmem:[%s1 + $0x11c] sm:$0xf]
  %v94 = vld [vmem:[%s1 + $0x120] sm:$0xf]
  %v95 = vld [vmem:[%s1 + $0x124] sm:$0xf]
  %v96 = vld [vmem:[%s1 + $0x128] sm:$0xf]
  %v97 = vld [vmem:[%s1 + $0x12c] sm:$0xf]
  %v98 = vld [vmem:[%s1 + $0x130] sm:$0xf]
  %v99 = vld [vmem:[%s1 + $0x134] sm:$0xf]
  %v100 = vld [vmem:[%s1 + $0x138] sm:$0xf]
  %v101 = vld [vmem:[%s1 + $0x13c] sm:$0xf]
  %v102 = vld [vmem:[%s1 + $0x140] sm:$0xf]
  %v103 = vld [vmem:[%s1 + $0x144] sm:$0xf]
  %v104 = vld [vmem:[%s1 + $0x148] sm:$0xf]
  %v105 = vld [vmem:[%s1 + $0x14c] sm:$0xf]
  %v106 = vld [vmem:[%s1 + $0x150] sm:$0xf]
  %v107 = vld [vmem:[%s1 + $0x154] sm:$0xf]
  %v108 = vld [vmem:[%s1 + $0x158] sm:$0xf]
  %v109 = vld [vmem:[%s1 + $0x15c] sm:$0xf]
  %v110 = vld [vmem:[%s1 + $0x160] sm:$0xf]
  %v111 = vld [vmem:[%s1 + $0x164] sm:$0xf]
  %v112 = vld [vmem:[%s1 + $0x168] sm:$0xf]
  %v113 = vld [vmem:[%s1 + $0x16c] sm:$0xf]
  %v114 = vld [vmem:[%s1 + $0x170] sm:$0xf]
  %v115 = vld [vmem:[%s1 + $0x174] sm:$0xf]
  %v116 = vld [vmem:[%s1 + $0x178] sm:$0xf]
  %v117 = vld [vmem:[%s1 + $0x17c] sm:$0xf]
  %v118 = vld [vmem:[%s1 + $0x180] sm:$0xf]
  %v119 = vld [vmem:[%s1 + $0x184] sm:$0xf]
  %v120 = vld [vmem:[%s1 + $0x188] sm:$0xf]
  %v121 = vld [vmem:[%s1 + $0x18c] sm:$0xf]
  %v122 = vld [vmem:[%s1 + $0x190] sm:$0xf]
  %v123 = vld [vmem:[%s1 + $0x194] sm:$0xf]
  %v124 = vld [vmem:[%s1 + $0x198] sm:$0xf]
  %v125 = vld [vmem:[%s1 + $0x19c] sm:$0xf]
  %v126 = vld [vmem:[%s1 + $0x1a0] sm:$0xf]
  %v127 = vld [vmem:[%s1 + $0x1a4] sm:$0xf]
  %v128 = vld [vmem:[%s1 + $0x1a8] sm:$0xf]
  %v129 = vld [vmem:[%s1 + $0x1ac] sm:$0xf]
  %v130 = vld [vmem:[%s1 + $0x1b0] sm:$0xf]
  %v131 = vld [vmem:[%s1 + $0x1b4] sm:$0xf]
  %v132 = vld [vmem:[%s1 + $0x1b8] sm:$0xf]
  %v133 = vld [vmem:[%s1 + $0x1bc] sm:$0xf]
  %v134 = vld [vmem:[%s1 + $0x1c0] sm:$0xf]
  %v135 = vld [vmem:[%s1 + $0x1c4] sm:$0xf]
  %v136 = vld [vmem:[%s1 + $0x1c8] sm:$0xf]
  %v137 = vld [vmem:[%s1 + $0x1cc] sm:$0xf]
  %v138 = vld [vmem:[%s1 + $0x1d0] sm:$0xf]
  %v139 = vld [vmem:[%s1 + $0x1d4] sm:$0xf]
  %v140 = vld [vmem:[%s1 + $0x1d8] sm:$0xf]
  %v141 = vld [vmem:[%s1 + $0x1dc] sm:$0xf]
  %v142 = vld [vmem:[%s1 + $0x1e0] sm:$0xf]
  %v143 = vld [vmem:[%s1 + $0x1e4] sm:$0xf]
  %v144 = vld [vmem:[%s1 + $0x1e8] sm:$0xf]
  %v145 = vld [vmem:[%s1 + $0x1ec] sm:$0xf]
  %v146 = vld [vmem:[%s1 + $0x1f0] sm:$0xf]
  %v147 = vld [vmem:[%s1 + $0x1f4] sm:$0xf]
  %v148 = vld [vmem:[%s1 + $0x1f8] sm:$0xf]
  %v149 = vld [vmem:[%s1 + $0x1fc] sm:$0xf]
  %v150 = vld [vmem:[%s2] sm:$0x1]
  %v152 = vperm.slane %v150, 0
  %v162 = vunpack.c.l.b16 %v14
  %v163 = vunpack.c.h.b16 %v14
  %v164 = vunpack.c.l.b16 %v15
  %v165 = vunpack.c.h.b16 %v15
  %v166 = vunpack.c.l.b16 %v16
  %v167 = vunpack.c.h.b16 %v16
  %v168 = vunpack.c.l.b16 %v17
  %v169 = vunpack.c.h.b16 %v17
  %v170 = vunpack.c.l.b16 %v18
  %v171 = vunpack.c.h.b16 %v18
  %v172 = vunpack.c.l.b16 %v19
  %v173 = vunpack.c.h.b16 %v19
  %v174 = vunpack.c.l.b16 %v20
  %v175 = vunpack.c.h.b16 %v20
  %v176 = vunpack.c.l.b16 %v21
  %v177 = vunpack.c.h.b16 %v21
  %v178 = vpack.c.b16 %v170, %v162
  %v179 = vpack.c.b16 %v171, %v163
  %v180 = vpack.c.b16 %v172, %v164
  %v181 = vpack.c.b16 %v173, %v165
  %v182 = vpack.c.b16 %v174, %v166
  %v183 = vpack.c.b16 %v175, %v167
  %v184 = vpack.c.b16 %v176, %v168
  %v185 = vpack.c.b16 %v177, %v169
  %v322 = vunpack.c.l.b16 %v22
  %v323 = vunpack.c.l.b16 %v23
  %v324 = vunpack.c.l.b16 %v24
  %v325 = vunpack.c.l.b16 %v25
  %v326 = vunpack.c.l.b16 %v26
  %v327 = vunpack.c.l.b16 %v27
  %v328 = vunpack.c.l.b16 %v28
  %v329 = vunpack.c.l.b16 %v29
  %v330 = vunpack.c.l.b16 %v30
  %v331 = vunpack.c.l.b16 %v31
  %v332 = vunpack.c.l.b16 %v32
  %v333 = vunpack.c.l.b16 %v33
  %v334 = vunpack.c.l.b16 %v34
  %v335 = vunpack.c.l.b16 %v35
  %v336 = vunpack.c.l.b16 %v36
  %v337 = vunpack.c.l.b16 %v37
  %v338 = vunpack.c.l.b16 %v38
  %v339 = vunpack.c.l.b16 %v39
  %v340 = vunpack.c.l.b16 %v40
  %v341 = vunpack.c.l.b16 %v41
  %v342 = vunpack.c.l.b16 %v42
  %v343 = vunpack.c.l.b16 %v43
  %v344 = vunpack.c.l.b16 %v44
  %v345 = vunpack.c.l.b16 %v45
  %v346 = vunpack.c.l.b16 %v46
  %v347 = vunpack.c.l.b16 %v47
  %v348 = vunpack.c.l.b16 %v48
  %v349 = vunpack.c.l.b16 %v49
  %v350 = vunpack.c.l.b16 %v50
  %v351 = vunpack.c.l.b16 %v51
  %v352 = vunpack.c.l.b16 %v52
  %v353 = vunpack.c.l.b16 %v53
  %v354 = vunpack.c.l.b16 %v54
  %v355 = vunpack.c.l.b16 %v55
  %v356 = vunpack.c.l.b16 %v56
  %v357 = vunpack.c.l.b16 %v57
  %v358 = vunpack.c.l.b16 %v58
  %v359 = vunpack.c.l.b16 %v59
  %v360 = vunpack.c.l.b16 %v60
  %v361 = vunpack.c.l.b16 %v61
  %v362 = vunpack.c.l.b16 %v62
  %v363 = vunpack.c.l.b16 %v63
  %v364 = vunpack.c.l.b16 %v64
  %v365 = vunpack.c.l.b16 %v65
  %v366 = vunpack.c.l.b16 %v66
  %v367 = vunpack.c.l.b16 %v67
  %v368 = vunpack.c.l.b16 %v68
  %v369 = vunpack.c.l.b16 %v69
  %v370 = vunpack.c.l.b16 %v70
  %v371 = vunpack.c.l.b16 %v71
  %v372 = vunpack.c.l.b16 %v72
  %v373 = vunpack.c.l.b16 %v73
  %v374 = vunpack.c.l.b16 %v74
  %v375 = vunpack.c.l.b16 %v75
  %v376 = vunpack.c.l.b16 %v76
  %v377 = vunpack.c.l.b16 %v77
  %v378 = vunpack.c.l.b16 %v78
  %v379 = vunpack.c.l.b16 %v79
  %v380 = vunpack.c.l.b16 %v80
  %v381 = vunpack.c.l.b16 %v81
  %v382 = vunpack.c.l.b16 %v82
  %v383 = vunpack.c.l.b16 %v83
  %v384 = vunpack.c.l.b16 %v84
  %v385 = vunpack.c.l.b16 %v85
  %v386 = vunpack.c.l.b16 %v86
  %v387 = vunpack.c.l.b16 %v87
  %v388 = vunpack.c.l.b16 %v88
  %v389 = vunpack.c.l.b16 %v89
  %v390 = vunpack.c.l.b16 %v90
  %v391 = vunpack.c.l.b16 %v91
  %v392 = vunpack.c.l.b16 %v92
  %v393 = vunpack.c.l.b16 %v93
  %v394 = vunpack.c.l.b16 %v94
  %v395 = vunpack.c.l.b16 %v95
  %v396 = vunpack.c.l.b16 %v96
  %v397 = vunpack.c.l.b16 %v97
  %v398 = vunpack.c.l.b16 %v98
  %v399 = vunpack.c.l.b16 %v99
  %v400 = vunpack.c.l.b16 %v100
  %v401 = vunpack.c.l.b16 %v101
  %v402 = vunpack.c.l.b16 %v102
  %v403 = vunpack.c.l.b16 %v103
  %v404 = vunpack.c.l.b16 %v104
  %v405 = vunpack.c.l.b16 %v105
  %v406 = vunpack.c.l.b16 %v106
  %v407 = vunpack.c.l.b16 %v107
  %v408 = vunpack.c.l.b16 %v108
  %v409 = vunpack.c.l.b16 %v109
  %v410 = vunpack.c.l.b16 %v110
  %v411 = vunpack.c.l.b16 %v111
  %v412 = vunpack.c.l.b16 %v112
  %v413 = vunpack.c.l.b16 %v113
  %v414 = vunpack.c.l.b16 %v114
  %v415 = vunpack.c.l.b16 %v115
  %v416 = vunpack.c.l.b16 %v116
  %v417 = vunpack.c.l.b16 %v117
  %v418 = vunpack.c.l.b16 %v118
  %v419 = vunpack.c.l.b16 %v119
  %v420 = vunpack.c.l.b16 %v120
  %v421 = vunpack.c.l.b16 %v121
  %v422 = vunpack.c.l.b16 %v122
  %v423 = vunpack.c.l.b16 %v123
  %v424 = vunpack.c.l.b16 %v124
  %v425 = vunpack.c.l.b16 %v125
  %v426 = vunpack.c.l.b16 %v126
  %v427 = vunpack.c.l.b16 %v127
  %v428 = vunpack.c.l.b16 %v128
  %v429 = vunpack.c.l.b16 %v129
  %v430 = vunpack.c.l.b16 %v130
  %v431 = vunpack.c.l.b16 %v131
  %v432 = vunpack.c.l.b16 %v132
  %v433 = vunpack.c.l.b16 %v133
  %v434 = vunpack.c.l.b16 %v134
  %v435 = vunpack.c.l.b16 %v135
  %v436 = vunpack.c.l.b16 %v136
  %v437 = vunpack.c.l.b16 %v137
  %v438 = vunpack.c.l.b16 %v138
  %v439 = vunpack.c.l.b16 %v139
  %v440 = vunpack.c.l.b16 %v140
  %v441 = vunpack.c.l.b16 %v141
  %v442 = vunpack.c.l.b16 %v142
  %v443 = vunpack.c.l.b16 %v143
  %v444 = vunpack.c.l.b16 %v144
  %v445 = vunpack.c.l.b16 %v145
  %v446 = vunpack.c.l.b16 %v146
  %v447 = vunpack.c.l.b16 %v147
  %v448 = vunpack.c.l.b16 %v148
  %v449 = vunpack.c.l.b16 %v149
  %v450 = vpack.c.b16 %v323, %v322
  %v451 = vpack.c.b16 %v325, %v324
  %v452 = vpack.c.b16 %v327, %v326
  %v453 = vpack.c.b16 %v329, %v328
  %v454 = vpack.c.b16 %v331, %v330
  %v455 = vpack.c.b16 %v333, %v332
  %v456 = vpack.c.b16 %v335, %v334
  %v457 = vpack.c.b16 %v337, %v336
  %v458 = vpack.c.b16 %v339, %v338
  %v459 = vpack.c.b16 %v341, %v340
  %v460 = vpack.c.b16 %v343, %v342
  %v461 = vpack.c.b16 %v345, %v344
  %v462 = vpack.c.b16 %v347, %v346
  %v463 = vpack.c.b16 %v349, %v348
  %v464 = vpack.c.b16 %v351, %v350
  %v465 = vpack.c.b16 %v353, %v352
  %v466 = vpack.c.b16 %v355, %v354
  %v467 = vpack.c.b16 %v357, %v356
  %v468 = vpack.c.b16 %v359, %v358
  %v469 = vpack.c.b16 %v361, %v360
  %v470 = vpack.c.b16 %v363, %v362
  %v471 = vpack.c.b16 %v365, %v364
  %v472 = vpack.c.b16 %v367, %v366
  %v473 = vpack.c.b16 %v369, %v368
  %v474 = vpack.c.b16 %v371, %v370
  %v475 = vpack.c.b16 %v373, %v372
  %v476 = vpack.c.b16 %v375, %v374
  %v477 = vpack.c.b16 %v377, %v376
  %v478 = vpack.c.b16 %v379, %v378
  %v479 = vpack.c.b16 %v381, %v380
  %v480 = vpack.c.b16 %v383, %v382
  %v481 = vpack.c.b16 %v385, %v384
  %v482 = vpack.c.b16 %v387, %v386
  %v483 = vpack.c.b16 %v389, %v388
  %v484 = vpack.c.b16 %v391, %v390
  %v485 = vpack.c.b16 %v393, %v392
  %v486 = vpack.c.b16 %v395, %v394
  %v487 = vpack.c.b16 %v397, %v396
  %v488 = vpack.c.b16 %v399, %v398
  %v489 = vpack.c.b16 %v401, %v400
  %v490 = vpack.c.b16 %v403, %v402
  %v491 = vpack.c.b16 %v405, %v404
  %v492 = vpack.c.b16 %v407, %v406
  %v493 = vpack.c.b16 %v409, %v408
  %v494 = vpack.c.b16 %v411, %v410
  %v495 = vpack.c.b16 %v413, %v412
  %v496 = vpack.c.b16 %v415, %v414
  %v497 = vpack.c.b16 %v417, %v416
  %v498 = vpack.c.b16 %v419, %v418
  %v499 = vpack.c.b16 %v421, %v420
  %v500 = vpack.c.b16 %v423, %v422
  %v501 = vpack.c.b16 %v425, %v424
  %v502 = vpack.c.b16 %v427, %v426
  %v503 = vpack.c.b16 %v429, %v428
  %v504 = vpack.c.b16 %v431, %v430
  %v505 = vpack.c.b16 %v433, %v432
  %v506 = vpack.c.b16 %v435, %v434
  %v507 = vpack.c.b16 %v437, %v436
  %v508 = vpack.c.b16 %v439, %v438
  %v509 = vpack.c.b16 %v441, %v440
  %v510 = vpack.c.b16 %v443, %v442
  %v511 = vpack.c.b16 %v445, %v444
  %v512 = vpack.c.b16 %v447, %v446
  %v513 = vpack.c.b16 %v449, %v448
  %578 = vmatpush.bf16.msra.mxu0 %v457
  %579 = vmatpush.bf16.msra.mxu0 %v456
  %580 = vmatpush.bf16.msra.mxu0 %v455
  %581 = vmatpush.bf16.msra.mxu0 %v454
  %582 = vmatpush.bf16.msra.mxu0 %v453
  %583 = vmatpush.bf16.msra.mxu0 %v452
  %584 = vmatpush.bf16.msra.mxu0 %v451
  %585 = vmatpush.bf16.msra.mxu0 %v450
  %586 = vmatmul.bf16.gmra.mxu0 %v178
  %v587 = vpop.f32.mrf.mxu0
  %v588 = vadd.f32 %v152, %v587
  %v589 = vpop.f32.mrf.mxu0
  %v590 = vadd.f32 %v152, %v589
  %591 = vdwg.mxu0
  %592 = vmatpush.bf16.msra.mxu0 %v465
  %593 = vmatpush.bf16.msra.mxu0 %v464
  %594 = vmatpush.bf16.msra.mxu0 %v463
  %595 = vmatpush.bf16.msra.mxu0 %v462
  %596 = vmatpush.bf16.msra.mxu0 %v461
  %597 = vmatpush.bf16.msra.mxu0 %v460
  %598 = vmatpush.bf16.msra.mxu0 %v459
  %599 = vmatpush.bf16.msra.mxu0 %v458
  %600 = vmatmul.bf16.gmra.mxu0 %v179
  %v601 = vpop.f32.mrf.mxu0
  %v602 = vadd.f32 %v588, %v601
  %v603 = vpop.f32.mrf.mxu0
  %v604 = vadd.f32 %v590, %v603
  %605 = vdwg.mxu0
  %606 = vmatpush.bf16.msra.mxu0 %v473
  %607 = vmatpush.bf16.msra.mxu0 %v472
  %608 = vmatpush.bf16.msra.mxu0 %v471
  %609 = vmatpush.bf16.msra.mxu0 %v470
  %610 = vmatpush.bf16.msra.mxu0 %v469
  %611 = vmatpush.bf16.msra.mxu0 %v468
  %612 = vmatpush.bf16.msra.mxu0 %v467
  %613 = vmatpush.bf16.msra.mxu0 %v466
  %614 = vmatmul.bf16.gmra.mxu0 %v180
  %v615 = vpop.f32.mrf.mxu0
  %v616 = vadd.f32 %v602, %v615
  %v617 = vpop.f32.mrf.mxu0
  %v618 = vadd.f32 %v604, %v617
  %619 = vdwg.mxu0
  %620 = vmatpush.bf16.msra.mxu0 %v481
  %621 = vmatpush.bf16.msra.mxu0 %v480
  %622 = vmatpush.bf16.msra.mxu0 %v479
  %623 = vmatpush.bf16.msra.mxu0 %v478
  %624 = vmatpush.bf16.msra.mxu0 %v477
  %625 = vmatpush.bf16.msra.mxu0 %v476
  %626 = vmatpush.bf16.msra.mxu0 %v475
  %627 = vmatpush.bf16.msra.mxu0 %v474
  %628 = vmatmul.bf16.gmra.mxu0 %v181
  %v629 = vpop.f32.mrf.mxu0
  %v630 = vadd.f32 %v616, %v629
  %v631 = vpop.f32.mrf.mxu0
  %v632 = vadd.f32 %v618, %v631
  %633 = vdwg.mxu0
  %634 = vmatpush.bf16.msra.mxu0 %v489
  %635 = vmatpush.bf16.msra.mxu0 %v488
  %636 = vmatpush.bf16.msra.mxu0 %v487
  %637 = vmatpush.bf16.msra.mxu0 %v486
  %638 = vmatpush.bf16.msra.mxu0 %v485
  %639 = vmatpush.bf16.msra.mxu0 %v484
  %640 = vmatpush.bf16.msra.mxu0 %v483
  %641 = vmatpush.bf16.msra.mxu0 %v482
  %642 = vmatmul.bf16.gmra.mxu0 %v182
  %v643 = vpop.f32.mrf.mxu0
  %v644 = vadd.f32 %v630, %v643
  %v645 = vpop.f32.mrf.mxu0
  %v646 = vadd.f32 %v632, %v645
  %647 = vdwg.mxu0
  %648 = vmatpush.bf16.msra.mxu0 %v497
  %649 = vmatpush.bf16.msra.mxu0 %v496
  %650 = vmatpush.bf16.msra.mxu0 %v495
  %651 = vmatpush.bf16.msra.mxu0 %v494
  %652 = vmatpush.bf16.msra.mxu0 %v493
  %653 = vmatpush.bf16.msra.mxu0 %v492
  %654 = vmatpush.bf16.msra.mxu0 %v491
  %655 = vmatpush.bf16.msra.mxu0 %v490
  %656 = vmatmul.bf16.gmra.mxu0 %v183
  %v657 = vpop.f32.mrf.mxu0
  %v658 = vadd.f32 %v644, %v657
  %v659 = vpop.f32.mrf.mxu0
  %v660 = vadd.f32 %v646, %v659
  %661 = vdwg.mxu0
  %662 = vmatpush.bf16.msra.mxu0 %v505
  %663 = vmatpush.bf16.msra.mxu0 %v504
  %664 = vmatpush.bf16.msra.mxu0 %v503
  %665 = vmatpush.bf16.msra.mxu0 %v502
  %666 = vmatpush.bf16.msra.mxu0 %v501
  %667 = vmatpush.bf16.msra.mxu0 %v500
  %668 = vmatpush.bf16.msra.mxu0 %v499
  %669 = vmatpush.bf16.msra.mxu0 %v498
  %670 = vmatmul.bf16.gmra.mxu0 %v184
  %v671 = vpop.f32.mrf.mxu0
  %v672 = vadd.f32 %v658, %v671
  %v673 = vpop.f32.mrf.mxu0
  %v674 = vadd.f32 %v660, %v673
  %675 = vdwg.mxu0
  %676 = vmatpush.bf16.msra.mxu0 %v513
  %677 = vmatpush.bf16.msra.mxu0 %v512
  %678 = vmatpush.bf16.msra.mxu0 %v511
  %679 = vmatpush.bf16.msra.mxu0 %v510
  %680 = vmatpush.bf16.msra.mxu0 %v509
  %681 = vmatpush.bf16.msra.mxu0 %v508
  %682 = vmatpush.bf16.msra.mxu0 %v507
  %683 = vmatpush.bf16.msra.mxu0 %v506
  %684 = vmatmul.bf16.gmra.mxu0 %v185
  %v685 = vpop.f32.mrf.mxu0
  %v686 = vadd.f32 %v672, %v685
  %v687 = vpop.f32.mrf.mxu0
  %v688 = vadd.f32 %v674, %v687
  %689 = vdwg.mxu0
  %690 = vst [vmem:[%s3] sm:$0xff] %v686
  %691 = vst [vmem:[%s3 + $0x8] sm:$0xff] %v688
  // Predicated region
  $region14: #{_lambda_.15} parent=0 // pred_check
    _
  $region15: #{_lambda_.15} parent=0 // pred_check_branch
    %693 = sbr.rel (0) target = $region17
  $region16: #{_lambda_.15} parent=0 // pred_region
    _
  $region17: #{_lambda_.15} parent=0 // pred_fallthru
    _
  // Predicated region
  $region18: #{_lambda_.15} parent=0 // pred_check
    _
  $region19: #{_lambda_.15} parent=0 // pred_check_branch
    %695 = sbr.rel (0) target = $region21
  $region20: #{_lambda_.15} parent=0 // pred_region
    _
  $region21: #{_lambda_.15} parent=0 // pred_fallthru
    _

</llo_original>
